<compile_context>
chip_gen: v7x
topology: tpu7x:2x2x1
jax: 0.10.0
libtpu: 0.0.40
codegen_flags: <defaults>
</compile_context>

<pallas_src>
import functools

import jax
import jax.numpy as jnp
import numpy as np
from jax.experimental import pallas as pl
from jax.experimental.pallas import tpu as pltpu

# 16-entry codebooks (values normalized to [-1, 1]), mirroring bitsandbytes nf4/fp4.
NF4_CODEBOOK = (
    -1.0, -0.6961928009986877, -0.5250730514526367, -0.39491748809814453,
    -0.28444138169288635, -0.18477343022823334, -0.09105003625154495, 0.0,
    0.07958029955625534, 0.16093020141124725, 0.24611230194568634,
    0.33791524171829224, 0.44070982933044434, 0.5626170039176941,
    0.7229568362236023, 1.0,
)
FP4_CODEBOOK = (  # E2M1 grid normalized by 6 (synthetic ordering, self-consistent)
    -1.0, -2.0 / 3.0, -0.5, -1.0 / 3.0, -0.25, -1.0 / 6.0, -1.0 / 12.0, 0.0,
    0.0, 1.0 / 12.0, 1.0 / 6.0, 0.25, 1.0 / 3.0, 0.5, 2.0 / 3.0, 1.0,
)


def _round_up(x, m):
    return (x + m - 1) // m * m


def _decode4(nib, codebook):
    """16-entry LUT via a 4-level binary select tree on the nibble bits.

    nib: int32 array with values 0..15.  Costs 4 bit-tests + 15 selects on the
    VPU (vs 15 cmp + 15 selects for the naive chain).  Returns f32.
    """
    b0 = (nib & 1) != 0
    b1 = (nib & 2) != 0
    b2 = (nib & 4) != 0
    b3 = (nib & 8) != 0
    cb = [jnp.float32(v) for v in codebook]
    v = [jnp.where(b0, cb[2 * i + 1], cb[2 * i]) for i in range(8)]
    v = [jnp.where(b1, v[2 * i + 1], v[2 * i]) for i in range(4)]
    v = [jnp.where(b2, v[2 * i + 1], v[2 * i]) for i in range(2)]
    return jnp.where(b3, v[1], v[0])


def _qlinear_kernel(x_ref, packed_ref, absmax_ref, o_ref, *, codebook):
    kk = pl.program_id(2)

    @pl.when(kk == 0)
    def _():
        o_ref[...] = jnp.zeros_like(o_ref)

    n_sub = absmax_ref.shape[1]                    # quant blocks per K step (1 or 2)

    # --- decode two 4-bit codes per byte, scale on the weight side ---------------
    packed = packed_ref[...].astype(jnp.int32)     # (tk//2, tn), values 0..255
    scale = absmax_ref[0]                          # (n_sub, tn) f32, lane-dense rows
    lo = _decode4(packed & 0xF, codebook) * scale[0:1, :]            # K rows [0, tk/2)
    hi = _decode4(packed >> 4, codebook) * scale[n_sub - 1:n_sub, :]  # K rows [tk/2, tk)
    w = jnp.concatenate(
        [lo.astype(jnp.bfloat16), hi.astype(jnp.bfloat16)], axis=0)   # (tk, tn) bf16

    # --- MXU hot path: one wide canonical matmul, f32 accumulation in o_ref ------
    x_tile = x_ref[kk]                             # (tm, tk) bf16, dynamic K step
    o_ref[...] += jnp.dot(x_tile, w, preferred_element_type=jnp.float32)


def prepare_quantized_weight(codes, absmax, qblk):
    """One-time (weight-load time) repack of blockwise 4-bit weights.

    codes  : [N, K] int8, one 4-bit code (0..15) per element (torch Linear layout)
    absmax : [N, K//qblk] f32 per-block scales
    Returns (packed [K//2, N] uint8, absmax3 [K//tk, n_sub, N] f32, tk).
    """
    N, K = codes.shape
    n_kblk = K // qblk
    assert n_kblk * qblk == K
    n_sub = 2 if n_kblk % 2 == 0 else 1            # quant blocks folded per K step
    tk = n_sub * qblk
    half = tk // 2
    assert half % 8 == 0 and tk % 128 == 0

    # Transpose to [K, N] (K on sublanes, N on lanes). Within each tk block, pack
    # K row r (low nibble) with row r + tk/2 (high nibble): unpack in-kernel is a
    # pure shift/and with a single aligned sublane concat, no interleave.
    codes_t = codes.T.astype(jnp.uint8)                         # (K, N)
    ct = codes_t.reshape(K // tk, 2, half, N)
    packed = (ct[:, 0] | (ct[:, 1] << 4)).reshape(K // 2, N)    # uint8

    # Scales transposed and grouped per K step: absmax3[k, s] is the scale row of
    # quant block k*n_sub + s (lane-dense over N).
    absmax3 = absmax.astype(jnp.float32).T.reshape(K // tk, n_sub, N)
    return packed, absmax3, tk


def quantized_linear(x, packed, absmax3, codebook, tk, *, max_tm=512):
    """Pallas TPU forward of QuantizedLinear: in-kernel 4-bit dequant + matmul."""
    M, K = x.shape
    Kp2, N = packed.shape
    assert Kp2 * 2 == K and K % tk == 0
    n_k = K // tk
    n_sub = absmax3.shape[1]

    # M tile: minimize padding while amortizing the per-tile weight dequant.
    m_tiles = -(-M // max_tm)
    tm = _round_up(-(-M // m_tiles), 8)
    m_pad = _round_up(M, tm)

    # N tile: 256 fills the v6e/v7x 256-wide MXU; drop to 128 if that would leave a
    # single output tile (v7x has two TensorCores to feed).
    assert N % 128 == 0
    tn = 256 if N % 256 == 0 else 128
    if tn == 256 and (m_pad // tm) * (N // tn) < 2:
        tn = 128

    # bf16 activations, padded, K-step-major so the whole-K slab is VMEM-resident
    # across the (j, k) sweep and the K step is a leading-axis dynamic index.
    xb = x.astype(jnp.bfloat16)
    if m_pad != M:
        xb = jnp.pad(xb, ((0, m_pad - M), (0, 0)))
    x3 = xb.reshape(m_pad, n_k, tk).transpose(1, 0, 2)          # (n_k, m_pad, tk)

    # VMEM budget (double-buffered inputs/outputs); stays under v7x's smaller VMEM.
    vmem_est = 2 * (n_k * tm * tk * 2 + (tk // 2) * tn + n_sub * tn * 4 + tm * tn * 4)
    vmem_limit = int(min(max(2 * vmem_est, 32 * 2**20), 64 * 2**20))

    kernel = functools.partial(
        _qlinear_kernel, codebook=tuple(float(v) for v in codebook))

    out = pl.pallas_call(
        kernel,
        out_shape=jax.ShapeDtypeStruct((m_pad, N), jnp.float32),
        grid_spec=pltpu.PrefetchScalarGridSpec(
            num_scalar_prefetch=0,
            grid=(m_pad // tm, N // tn, n_k),
            in_specs=[
                pl.BlockSpec((n_k, tm, tk), lambda i, j, k: (0, i, 0)),   # x slab
                pl.BlockSpec((tk // 2, tn), lambda i, j, k: (k, j)),      # packed nibbles
                pl.BlockSpec((1, n_sub, tn), lambda i, j, k: (k, 0, j)),  # absmax rows
            ],
            out_specs=pl.BlockSpec((tm, tn), lambda i, j, k: (i, j)),
        ),
        compiler_params=pltpu.CompilerParams(
            dimension_semantics=("parallel", "parallel", "arbitrary"),
            vmem_limit_bytes=vmem_limit),
    )(x3, packed, absmax3)
    return out[:M]


def nf4_quantize(weight, qblk):
    """Synthetic stand-in for NF4Quantization.quantize (blockwise absmax 4-bit)."""
    max_val = float(jnp.max(weight))
    min_val = float(jnp.min(weight))
    ratio = -(min_val / max_val)
    quant_type = "fp4" if (ratio < 0.5 or ratio > 2.0) else "nf4"
    codebook = FP4_CODEBOOK if quant_type == "fp4" else NF4_CODEBOOK

    N, K = weight.shape
    wb = weight.reshape(N, K // qblk, qblk)
    absmax = jnp.max(jnp.abs(wb), axis=-1, keepdims=True)             # (N, K//qblk, 1)
    wn = wb / absmax
    cb = jnp.asarray(codebook, dtype=jnp.float32)
    codes = jnp.argmin(jnp.abs(wn[..., None] - cb), axis=-1)          # nearest code 0..15
    codes = codes.reshape(N, K).astype(jnp.int8)
    absmax = absmax.reshape(N, K // qblk).astype(jnp.float32)
    return codes, absmax, codebook, quant_type


def nf4_dequantize_ref(codes, absmax, codebook, qblk):
    cb = jnp.asarray(codebook, dtype=jnp.float32)
    N, K = codes.shape
    w = cb[codes.astype(jnp.int32)].reshape(N, K // qblk, qblk)
    return (w * absmax[..., None]).reshape(N, K)


if __name__ == "__main__":
    M, K, N = 100, 256, 256      # tokens, in_features, out_features (M exercises padding)
    QBLK = 128                   # quantization block size

    key = jax.random.PRNGKey(0)
    kx, kw = jax.random.split(key)
    x = jax.random.normal(kx, (M, K), dtype=jnp.float32)
    # deterministic "trained" weight, torch nn.Linear layout [out_features, in_features]
    weight = jax.random.normal(kw, (N, K), dtype=jnp.float32) * (1.0 / np.sqrt(K))

    codes, absmax, codebook, quant_type = nf4_quantize(weight, QBLK)
    # Done once at weight-load time (not per forward), per review.
    packed, absmax3, tk = prepare_quantized_weight(codes, absmax, QBLK)

    out = quantized_linear(x, packed, absmax3, codebook, tk)
    out = jax.block_until_ready(out)

    # reference: dequantize then nn.functional.linear(x, w, None) == x @ w.T
    # (tolerance loosened vs. pure-f32 because the kernel feeds the MXU bf16 inputs;
    #  the bf16 rounding error is far below the 4-bit quantization error itself)
    w_deq = nf4_dequantize_ref(codes, absmax, codebook, QBLK)
    ref = x @ w_deq.T
    np.testing.assert_allclose(np.asarray(out), np.asarray(ref), rtol=3e-2, atol=3e-2)
    print("KERNEL_OK")
</pallas_src>

<mosaic_0001>
module attributes {stable_mosaic.version = 11 : i64} {
  func.func @_qlinear_kernel(%arg0: i32, %arg1: i32, %arg2: i32, %arg3: memref<1x104x256xbf16, #tpu.memory_space<vmem>>, %arg4: memref<128x128xi8, #tpu.memory_space<vmem>>, %arg5: memref<1x2x128xf32, #tpu.memory_space<vmem>>, %arg6: memref<104x128xf32, #tpu.memory_space<vmem>>) attributes {dimension_semantics = [#tpu.dimension_semantics<parallel>, #tpu.dimension_semantics<parallel>, #tpu.dimension_semantics<arbitrary>], iteration_bounds = array<i64: 1, 2, 1>, scalar_prefetch = 0 : i64, scratch_operands = 0 : i64, tpu.core_type = #tpu.core_type<tc>, window_params = [{transform_indices = @transform_0, window_bounds = array<i64: 1, 104, 256>}, {transform_indices = @transform_1, window_bounds = array<i64: 128, 128>}, {transform_indices = @transform_2, window_bounds = array<i64: 1, 2, 128>}, {transform_indices = @transform_3, window_bounds = array<i64: 104, 128>}]} {
    %c0_i32 = arith.constant 0 : i32
    %0 = arith.cmpi eq, %arg2, %c0_i32 : i32
    %1 = arith.extui %0 : i1 to i32
    %c0_i32_0 = arith.constant 0 : i32
    %2 = arith.cmpi ne, %1, %c0_i32_0 : i32
    scf.if %2 {
      %cst_56 = arith.constant 0.000000e+00 : f32
      %121 = vector.broadcast %cst_56 : f32 to vector<104x128xf32>
      %c0_57 = arith.constant 0 : index
      %c0_58 = arith.constant 0 : index
      %122 = vector.load %arg6[%c0_57, %c0_58] : memref<104x128xf32, #tpu.memory_space<vmem>>, vector<104x128xf32>
      tpu.vector_store %arg6[%c0_57, %c0_58], %121 {strides = array<i32>} : memref<104x128xf32, #tpu.memory_space<vmem>>, vector<104x128xf32>,
    } else {
    }
    %c0 = arith.constant 0 : index
    %c0_1 = arith.constant 0 : index
    %3 = vector.load %arg4[%c0, %c0_1] : memref<128x128xi8, #tpu.memory_space<vmem>>, vector<128x128xi8>
    %4 = arith.extui %3 : vector<128x128xi8> to vector<128x128xi32>
    %c0_2 = arith.constant 0 : index
    %c0_3 = arith.constant 0 : index
    %c0_4 = arith.constant 0 : index
    %5 = vector.load %arg5[%c0_2, %c0_3, %c0_4] : memref<1x2x128xf32, #tpu.memory_space<vmem>>, vector<1x2x128xf32>
    %6 = vector.shape_cast %5 : vector<1x2x128xf32> to vector<2x128xf32>
    %c15_i32 = arith.constant 15 : i32
    %7 = vector.broadcast %c15_i32 : i32 to vector<128x128xi32>
    %8 = arith.andi %4, %7 : vector<128x128xi32>
    %c1_i32 = arith.constant 1 : i32
    %9 = vector.broadcast %c1_i32 : i32 to vector<128x128xi32>
    %10 = arith.andi %8, %9 : vector<128x128xi32>
    %c0_i32_5 = arith.constant 0 : i32
    %11 = vector.broadcast %c0_i32_5 : i32 to vector<128x128xi32>
    %12 = arith.cmpi ne, %10, %11 : vector<128x128xi32>
    %c2_i32 = arith.constant 2 : i32
    %13 = vector.broadcast %c2_i32 : i32 to vector<128x128xi32>
    %14 = arith.andi %8, %13 : vector<128x128xi32>
    %c0_i32_6 = arith.constant 0 : i32
    %15 = vector.broadcast %c0_i32_6 : i32 to vector<128x128xi32>
    %16 = arith.cmpi ne, %14, %15 : vector<128x128xi32>
    %c4_i32 = arith.constant 4 : i32
    %17 = vector.broadcast %c4_i32 : i32 to vector<128x128xi32>
    %18 = arith.andi %8, %17 : vector<128x128xi32>
    %c0_i32_7 = arith.constant 0 : i32
    %19 = vector.broadcast %c0_i32_7 : i32 to vector<128x128xi32>
    %20 = arith.cmpi ne, %18, %19 : vector<128x128xi32>
    %c8_i32 = arith.constant 8 : i32
    %21 = vector.broadcast %c8_i32 : i32 to vector<128x128xi32>
    %22 = arith.andi %8, %21 : vector<128x128xi32>
    %c0_i32_8 = arith.constant 0 : i32
    %23 = vector.broadcast %c0_i32_8 : i32 to vector<128x128xi32>
    %24 = arith.cmpi ne, %22, %23 : vector<128x128xi32>
    %cst = arith.constant -0.6961928 : f32
    %cst_9 = arith.constant -1.000000e+00 : f32
    %25 = vector.broadcast %cst : f32 to vector<128x128xf32>
    %26 = vector.broadcast %cst_9 : f32 to vector<128x128xf32>
    %27 = arith.select %12, %25, %26 : vector<128x128xi1>, vector<128x128xf32>
    %cst_10 = arith.constant -0.394917488 : f32
    %cst_11 = arith.constant -0.525073051 : f32
    %28 = vector.broadcast %cst_10 : f32 to vector<128x128xf32>
    %29 = vector.broadcast %cst_11 : f32 to vector<128x128xf32>
    %30 = arith.select %12, %28, %29 : vector<128x128xi1>, vector<128x128xf32>
    %cst_12 = arith.constant -0.18477343 : f32
    %cst_13 = arith.constant -0.284441382 : f32
    %31 = vector.broadcast %cst_12 : f32 to vector<128x128xf32>
    %32 = vector.broadcast %cst_13 : f32 to vector<128x128xf32>
    %33 = arith.select %12, %31, %32 : vector<128x128xi1>, vector<128x128xf32>
    %cst_14 = arith.constant 0.000000e+00 : f32
    %cst_15 = arith.constant -0.0910500362 : f32
    %34 = vector.broadcast %cst_14 : f32 to vector<128x128xf32>
    %35 = vector.broadcast %cst_15 : f32 to vector<128x128xf32>
    %36 = arith.select %12, %34, %35 : vector<128x128xi1>, vector<128x128xf32>
    %cst_16 = arith.constant 0.160930201 : f32
    %cst_17 = arith.constant 0.0795802995 : f32
    %37 = vector.broadcast %cst_16 : f32 to vector<128x128xf32>
    %38 = vector.broadcast %cst_17 : f32 to vector<128x128xf32>
    %39 = arith.select %12, %37, %38 : vector<128x128xi1>, vector<128x128xf32>
    %cst_18 = arith.constant 0.337915242 : f32
    %cst_19 = arith.constant 0.246112302 : f32
    %40 = vector.broadcast %cst_18 : f32 to vector<128x128xf32>
    %41 = vector.broadcast %cst_19 : f32 to vector<128x128xf32>
    %42 = arith.select %12, %40, %41 : vector<128x128xi1>, vector<128x128xf32>
    %cst_20 = arith.constant 5.626170e-01 : f32
    %cst_21 = arith.constant 0.440709829 : f32
    %43 = vector.broadcast %cst_20 : f32 to vector<128x128xf32>
    %44 = vector.broadcast %cst_21 : f32 to vector<128x128xf32>
    %45 = arith.select %12, %43, %44 : vector<128x128xi1>, vector<128x128xf32>
    %cst_22 = arith.constant 1.000000e+00 : f32
    %cst_23 = arith.constant 0.722956836 : f32
    %46 = vector.broadcast %cst_22 : f32 to vector<128x128xf32>
    %47 = vector.broadcast %cst_23 : f32 to vector<128x128xf32>
    %48 = arith.select %12, %46, %47 : vector<128x128xi1>, vector<128x128xf32>
    %49 = arith.select %16, %30, %27 : vector<128x128xi1>, vector<128x128xf32>
    %50 = arith.select %16, %36, %33 : vector<128x128xi1>, vector<128x128xf32>
    %51 = arith.select %16, %42, %39 : vector<128x128xi1>, vector<128x128xf32>
    %52 = arith.select %16, %48, %45 : vector<128x128xi1>, vector<128x128xf32>
    %53 = arith.select %20, %50, %49 : vector<128x128xi1>, vector<128x128xf32>
    %54 = arith.select %20, %52, %51 : vector<128x128xi1>, vector<128x128xf32>
    %55 = arith.select %24, %54, %53 : vector<128x128xi1>, vector<128x128xf32>
    %56 = vector.extract_strided_slice %6 {offsets = [0, 0], sizes = [1, 128], strides = [1, 1]} : vector<2x128xf32> to vector<1x128xf32>
    %57 = vector.broadcast %56 : vector<1x128xf32> to vector<128x128xf32>
    %58 = arith.mulf %55, %57 : vector<128x128xf32>
    %c4_i32_24 = arith.constant 4 : i32
    %59 = vector.broadcast %c4_i32_24 : i32 to vector<128x128xi32>
    %60 = arith.shrsi %4, %59 : vector<128x128xi32>
    %c1_i32_25 = arith.constant 1 : i32
    %61 = vector.broadcast %c1_i32_25 : i32 to vector<128x128xi32>
    %62 = arith.andi %60, %61 : vector<128x128xi32>
    %c0_i32_26 = arith.constant 0 : i32
    %63 = vector.broadcast %c0_i32_26 : i32 to vector<128x128xi32>
    %64 = arith.cmpi ne, %62, %63 : vector<128x128xi32>
    %c2_i32_27 = arith.constant 2 : i32
    %65 = vector.broadcast %c2_i32_27 : i32 to vector<128x128xi32>
    %66 = arith.andi %60, %65 : vector<128x128xi32>
    %c0_i32_28 = arith.constant 0 : i32
    %67 = vector.broadcast %c0_i32_28 : i32 to vector<128x128xi32>
    %68 = arith.cmpi ne, %66, %67 : vector<128x128xi32>
    %c4_i32_29 = arith.constant 4 : i32
    %69 = vector.broadcast %c4_i32_29 : i32 to vector<128x128xi32>
    %70 = arith.andi %60, %69 : vector<128x128xi32>
    %c0_i32_30 = arith.constant 0 : i32
    %71 = vector.broadcast %c0_i32_30 : i32 to vector<128x128xi32>
    %72 = arith.cmpi ne, %70, %71 : vector<128x128xi32>
    %c8_i32_31 = arith.constant 8 : i32
    %73 = vector.broadcast %c8_i32_31 : i32 to vector<128x128xi32>
    %74 = arith.andi %60, %73 : vector<128x128xi32>
    %c0_i32_32 = arith.constant 0 : i32
    %75 = vector.broadcast %c0_i32_32 : i32 to vector<128x128xi32>
    %76 = arith.cmpi ne, %74, %75 : vector<128x128xi32>
    %cst_33 = arith.constant -0.6961928 : f32
    %cst_34 = arith.constant -1.000000e+00 : f32
    %77 = vector.broadcast %cst_33 : f32 to vector<128x128xf32>
    %78 = vector.broadcast %cst_34 : f32 to vector<128x128xf32>
    %79 = arith.select %64, %77, %78 : vector<128x128xi1>, vector<128x128xf32>
    %cst_35 = arith.constant -0.394917488 : f32
    %cst_36 = arith.constant -0.525073051 : f32
    %80 = vector.broadcast %cst_35 : f32 to vector<128x128xf32>
    %81 = vector.broadcast %cst_36 : f32 to vector<128x128xf32>
    %82 = arith.select %64, %80, %81 : vector<128x128xi1>, vector<128x128xf32>
    %cst_37 = arith.constant -0.18477343 : f32
    %cst_38 = arith.constant -0.284441382 : f32
    %83 = vector.broadcast %cst_37 : f32 to vector<128x128xf32>
    %84 = vector.broadcast %cst_38 : f32 to vector<128x128xf32>
    %85 = arith.select %64, %83, %84 : vector<128x128xi1>, vector<128x128xf32>
    %cst_39 = arith.constant 0.000000e+00 : f32
    %cst_40 = arith.constant -0.0910500362 : f32
    %86 = vector.broadcast %cst_39 : f32 to vector<128x128xf32>
    %87 = vector.broadcast %cst_40 : f32 to vector<128x128xf32>
    %88 = arith.select %64, %86, %87 : vector<128x128xi1>, vector<128x128xf32>
    %cst_41 = arith.constant 0.160930201 : f32
    %cst_42 = arith.constant 0.0795802995 : f32
    %89 = vector.broadcast %cst_41 : f32 to vector<128x128xf32>
    %90 = vector.broadcast %cst_42 : f32 to vector<128x128xf32>
    %91 = arith.select %64, %89, %90 : vector<128x128xi1>, vector<128x128xf32>
    %cst_43 = arith.constant 0.337915242 : f32
    %cst_44 = arith.constant 0.246112302 : f32
    %92 = vector.broadcast %cst_43 : f32 to vector<128x128xf32>
    %93 = vector.broadcast %cst_44 : f32 to vector<128x128xf32>
    %94 = arith.select %64, %92, %93 : vector<128x128xi1>, vector<128x128xf32>
    %cst_45 = arith.constant 5.626170e-01 : f32
    %cst_46 = arith.constant 0.440709829 : f32
    %95 = vector.broadcast %cst_45 : f32 to vector<128x128xf32>
    %96 = vector.broadcast %cst_46 : f32 to vector<128x128xf32>
    %97 = arith.select %64, %95, %96 : vector<128x128xi1>, vector<128x128xf32>
    %cst_47 = arith.constant 1.000000e+00 : f32
    %cst_48 = arith.constant 0.722956836 : f32
    %98 = vector.broadcast %cst_47 : f32 to vector<128x128xf32>
    %99 = vector.broadcast %cst_48 : f32 to vector<128x128xf32>
    %100 = arith.select %64, %98, %99 : vector<128x128xi1>, vector<128x128xf32>
    %101 = arith.select %68, %82, %79 : vector<128x128xi1>, vector<128x128xf32>
    %102 = arith.select %68, %88, %85 : vector<128x128xi1>, vector<128x128xf32>
    %103 = arith.select %68, %94, %91 : vector<128x128xi1>, vector<128x128xf32>
    %104 = arith.select %68, %100, %97 : vector<128x128xi1>, vector<128x128xf32>
    %105 = arith.select %72, %102, %101 : vector<128x128xi1>, vector<128x128xf32>
    %106 = arith.select %72, %104, %103 : vector<128x128xi1>, vector<128x128xf32>
    %107 = arith.select %76, %106, %105 : vector<128x128xi1>, vector<128x128xf32>
    %108 = vector.extract_strided_slice %6 {offsets = [1, 0], sizes = [1, 128], strides = [1, 1]} : vector<2x128xf32> to vector<1x128xf32>
    %109 = vector.broadcast %108 : vector<1x128xf32> to vector<128x128xf32>
    %110 = arith.mulf %107, %109 : vector<128x128xf32>
    %111 = arith.truncf %58 : vector<128x128xf32> to vector<128x128xbf16>
    %112 = arith.truncf %110 : vector<128x128xf32> to vector<128x128xbf16>
    %113 = tpu.concatenate %111, %112 in 0 : vector<128x128xbf16>, vector<128x128xbf16> -> vector<256x128xbf16>
    %114 = arith.index_cast %arg2 : i32 to index
    %c0_49 = arith.constant 0 : index
    %c0_50 = arith.constant 0 : index
    %115 = vector.load %arg3[%114, %c0_49, %c0_50] : memref<1x104x256xbf16, #tpu.memory_space<vmem>>, vector<1x104x256xbf16>
    %116 = vector.shape_cast %115 : vector<1x104x256xbf16> to vector<104x256xbf16>
    %c0_51 = arith.constant 0 : index
    %c0_52 = arith.constant 0 : index
    %117 = vector.load %arg6[%c0_51, %c0_52] : memref<104x128xf32, #tpu.memory_space<vmem>>, vector<104x128xf32>
    %cst_53 = arith.constant dense<0.000000e+00> : vector<104x128xf32>
    %118 = tpu.matmul %116, %113, %cst_53 {dimension_numbers = #tpu.dot_dimension_numbers<[1], [0], [0], [1], [0, 0, 1, 1], [], []>} : vector<104x256xbf16>, vector<256x128xbf16>, vector<104x128xf32> -> vector<104x128xf32>
    %119 = arith.addf %117, %118 : vector<104x128xf32>
    %c0_54 = arith.constant 0 : index
    %c0_55 = arith.constant 0 : index
    %120 = vector.load %arg6[%c0_54, %c0_55] : memref<104x128xf32, #tpu.memory_space<vmem>>, vector<104x128xf32>
    tpu.vector_store %arg6[%c0_54, %c0_55], %119 {strides = array<i32>} : memref<104x128xf32, #tpu.memory_space<vmem>>, vector<104x128xf32>,
    return
  }
  func.func @transform_0(%arg0: i32, %arg1: i32, %arg2: i32) -> (i32, i32, i32) {
    %c0_i32 = arith.constant 0 : i32
    %c0_i32_0 = arith.constant 0 : i32
    %c0_i32_1 = arith.constant 0 : i32
    return %c0_i32, %arg0, %c0_i32_0 : i32, i32, i32
  }
  func.func @transform_1(%arg0: i32, %arg1: i32, %arg2: i32) -> (i32, i32) {
    %c0_i32 = arith.constant 0 : i32
    return %arg2, %arg1 : i32, i32
  }
  func.func @transform_2(%arg0: i32, %arg1: i32, %arg2: i32) -> (i32, i32, i32) {
    %c0_i32 = arith.constant 0 : i32
    %c0_i32_0 = arith.constant 0 : i32
    return %arg2, %c0_i32, %arg1 : i32, i32, i32
  }
  func.func @transform_3(%arg0: i32, %arg1: i32, %arg2: i32) -> (i32, i32) {
    %c0_i32 = arith.constant 0 : i32
    return %arg0, %arg1 : i32, i32
  }
}

</mosaic_0001>

<llo_original>
// kernel: tpu_custom_call.1
$region0: #{tpu_custom_call.1}
  #allocation0 [shape = 'u32[]', space=smem, size = 0x4, offset = 0x4, fixed_abs, tag = 'smem constant byte address 0x4 - core index']
  #allocation1 [shape = 'u32[144,128]{1,0:T(1,128)}', space=vmem, size = 0x12000, scoped, tag = 'internal scratch']
  %s0 = inlined_call_operand.hbm [shape: bf16[1,104,256], index: 0, kind: input, shape index: {}]
  %s1 = inlined_call_operand.hbm [shape: u8[128,256], index: 1, kind: input, shape index: {}]
  %s2 = inlined_call_operand.vmem [shape: f32[1,2,256], index: 2, kind: input, shape index: {}]
  %s3 = inlined_call_operand.hbm [shape: f32[104,256], index: 3, kind: output, shape index: {}]
  %s4 = sld [smem:[#allocation0]]
  $region57: #{tpu_custom_call.1} parent=0
    _
  %s6 = ssub.s32 1, %s4
  %s7 = scalar_select 0, %s6, %s4
  $region1: #{tpu_custom_call.1} parent=0
    #allocation2 [shape = 'u8[53248]{0}', space=vmem, size = 0xd000, scoped, tag = 'input window, operand 0, single buffered']
    #allocation3 [shape = 's32[2]{0}', space=sflag, size = 0x8, scoped, tag = 'scoped memory for tpu_custom_call.1']
    #allocation4 [shape = 's32[2]{0}', space=sflag, size = 0x8, scoped, tag = 'scoped memory for tpu_custom_call.1']
    #allocation5 [shape = 'u8[32768]{0}', space=vmem, size = 0x8000, scoped, tag = 'input window, operand 1']
    #allocation6 [shape = 's32[2]{0}', space=sflag, size = 0x8, scoped, tag = 'scoped memory for tpu_custom_call.1']
    #allocation7 [shape = 'u8[106496]{0}', space=vmem, size = 0x1a000, scoped, tag = 'output window, operand 0']
    %8 = vsyncpa [#allocation3], 0
    %9 = vsyncpa [#allocation6], 0
    %s10 = scalar_lea.sflag [#allocation6], 1
    %11 = vsyncpa %s10, 0
    %12 = vsyncpa [#allocation4], 0
    %s13 = scalar_lea.sflag [#allocation4], 1
    %14 = vsyncpa %s13, 0
    loop: start=0, step=1, limit=4
    $region2: #{tpu_custom_call.1} parent=1 // loop_pre_header
      _
    $region3: #{tpu_custom_call.1} parent=1 // loop_header
      %s16 = sphi 0, %s20
      %p17 = scmp.ge.s32.totalorder %s16, 4
      %s23 = sphi 0, %s42
      %s24 = sphi 0, %s38
      %s25 = sphi 0, %s34
      %s26 = sphi 0, %s23
      %s27 = sphi 0, %s24
      %s28 = sphi 0, %s25
      %s29 = sphi 0, %s26
      %s30 = sphi 0, %s27
      %s31 = sphi 0, %s28
      %s45 = sphi 0, %s47
      %s48 = sphi 0, %s45
      %s49 = sphi 0, %s48
      %s65 = sphi 0, %s49
      %s73 = sphi 0, %s75
      %s76 = sphi 0, %s73
      %s77 = sphi 0, %s76
      %s93 = sphi 0, %s77
      %s101 = sphi 0, %s103
      %s104 = sphi 0, %s101
      %s105 = sphi 0, %s104
      %s121 = sphi 0, %s105
      %s129 = sphi 0, %s131
      %s132 = sphi 0, %s129
      %s133 = sphi 0, %s132
      %s149 = sphi 0, %s133
    $region4: #{tpu_custom_call.1} parent=1 // loop_header_branch
      %19 = sbr.rel (%p17) target = $region8
    $region5: #{tpu_custom_call.1} parent=1 // loop_body
      %s21 = ssub.s32 %s16, 1
      %s22 = ssub.s32 %s16, 2
      %s32 = sadd.s32 1, %s25
      %p33 = scmp.ge.s32.totalorder %s32, 1
      %s34 = scalar_select %p33, 0, %s32
      %s35 = sadd.s32 1, %s24
      %s36 = scalar_select %p33, %s35, %s24
      %p37 = scmp.ge.s32.totalorder %s36, 2
      %s38 = scalar_select %p37, 0, %s36
      %s39 = sadd.s32 1, %s23
      %s40 = scalar_select %p37, %s39, %s23
      %p41 = scmp.ge.s32.totalorder %s40, 1
      %s42 = scalar_select %p41, 0, %s40
      %s43 = ssub.s32 %s23, %s42
      %p44 = scmp.eq.s32.totalorder %s43, 0
      %s46 = sadd.s32 %s45, 1
      %s47 = scalar_select %p44, %s45, %s46
      %p50 = pneg %p44
      %p51 = scmp.eq.s32.totalorder %s16, 1
      %p52 = por %p50, %p51
      %p53 = scmp.ne.s32.totalorder %s45, %s48
      %p54 = scmp.eq.s32.totalorder %s16, 0
      %p55 = por %p53, %p54
      %p56 = scmp.ne.s32.totalorder %s45, %s48
      %p57 = scmp.eq.s32.totalorder %s21, 1
      %p58 = por %p56, %p57
      %p59 = scmp.ne.s32.totalorder %s48, %s49
      %p60 = scmp.eq.s32.totalorder %s21, 0
      %p61 = por %p59, %p60
      %p62 = scmp.ne.s32.totalorder %s48, %s49
      %p63 = scmp.eq.s32.totalorder %s22, 1
      %p64 = por %p62, %p63
      %p66 = scmp.ne.s32.totalorder %s49, %s65
      %p67 = scmp.eq.s32.totalorder %s22, 0
      %p68 = por %p66, %p67
      %s69 = ssub.s32 %s25, %s34
      %s70 = ssub.s32 %s24, %s38
      %s71 = sor.u32 %s69, %s70
      %p72 = scmp.eq.s32.totalorder %s71, 0
      %s74 = sadd.s32 %s73, 1
      %s75 = scalar_select %p72, %s73, %s74
      %p78 = pneg %p72
      %p79 = scmp.eq.s32.totalorder %s16, 1
      %p80 = por %p78, %p79
      %p81 = scmp.ne.s32.totalorder %s73, %s76
      %p82 = scmp.eq.s32.totalorder %s16, 0
      %p83 = por %p81, %p82
      %p84 = scmp.ne.s32.totalorder %s73, %s76
      %p85 = scmp.eq.s32.totalorder %s21, 1
      %p86 = por %p84, %p85
      %p87 = scmp.ne.s32.totalorder %s76, %s77
      %p88 = scmp.eq.s32.totalorder %s21, 0
      %p89 = por %p87, %p88
      %p90 = scmp.ne.s32.totalorder %s76, %s77
      %p91 = scmp.eq.s32.totalorder %s22, 1
      %p92 = por %p90, %p91
      %p94 = scmp.ne.s32.totalorder %s77, %s93
      %p95 = scmp.eq.s32.totalorder %s22, 0
      %p96 = por %p94, %p95
      %s97 = ssub.s32 %s25, %s34
      %s98 = ssub.s32 %s24, %s38
      %s99 = sor.u32 %s97, %s98
      %p100 = scmp.eq.s32.totalorder %s99, 0
      %s102 = sadd.s32 %s101, 1
      %s103 = scalar_select %p100, %s101, %s102
      %p106 = pneg %p100
      %p107 = scmp.eq.s32.totalorder %s16, 1
      %p108 = por %p106, %p107
      %p109 = scmp.ne.s32.totalorder %s101, %s104
      %p110 = scmp.eq.s32.totalorder %s16, 0
      %p111 = por %p109, %p110
      %p112 = scmp.ne.s32.totalorder %s101, %s104
      %p113 = scmp.eq.s32.totalorder %s21, 1
      %p114 = por %p112, %p113
      %p115 = scmp.ne.s32.totalorder %s104, %s105
      %p116 = scmp.eq.s32.totalorder %s21, 0
      %p117 = por %p115, %p116
      %p118 = scmp.ne.s32.totalorder %s104, %s105
      %p119 = scmp.eq.s32.totalorder %s22, 1
      %p120 = por %p118, %p119
      %p122 = scmp.ne.s32.totalorder %s105, %s121
      %p123 = scmp.eq.s32.totalorder %s22, 0
      %p124 = por %p122, %p123
      %s125 = ssub.s32 %s23, %s42
      %s126 = ssub.s32 %s24, %s38
      %s127 = sor.u32 %s125, %s126
      %p128 = scmp.eq.s32.totalorder %s127, 0
      %s130 = sadd.s32 %s129, 1
      %s131 = scalar_select %p128, %s129, %s130
      %p134 = pneg %p128
      %p135 = scmp.eq.s32.totalorder %s16, 1
      %p136 = por %p134, %p135
      %p137 = scmp.ne.s32.totalorder %s129, %s132
      %p138 = scmp.eq.s32.totalorder %s16, 0
      %p139 = por %p137, %p138
      %p140 = scmp.ne.s32.totalorder %s129, %s132
      %p141 = scmp.eq.s32.totalorder %s21, 1
      %p142 = por %p140, %p141
      %p143 = scmp.ne.s32.totalorder %s132, %s133
      %p144 = scmp.eq.s32.totalorder %s21, 0
      %p145 = por %p143, %p144
      %p146 = scmp.ne.s32.totalorder %s132, %s133
      %p147 = scmp.eq.s32.totalorder %s22, 1
      %p148 = por %p146, %p147
      %p150 = scmp.ne.s32.totalorder %s133, %s149
      %p151 = scmp.eq.s32.totalorder %s22, 0
      %p152 = por %p150, %p151
      %p153 = scmp.le.s32.totalorder 1, %s16
      %p154 = scmp.lt.s32.totalorder %s16, 3
      %p155 = pnand %p153, %p154
      %p156 = pneg %p155
      // Predicated region
      $region9: #{tpu_custom_call.1} parent=5 // pred_check
        _
      $region10: #{tpu_custom_call.1} parent=5 // pred_check_branch
        %158 = sbr.rel (%p155) target = $region12
      $region11: #{tpu_custom_call.1} parent=5 // pred_region
        %s159 = ssub.s32 %s16, 1
        // Predicated region
        $region13: #{tpu_custom_call.1} parent=11 // pred_check
          %p160 = pneg %p61
        $region14: #{tpu_custom_call.1} parent=11 // pred_check_branch
          %162 = sbr.rel (%p160) target = $region16
        $region15: #{tpu_custom_call.1} parent=11 // pred_region
          %s163 = smul.u32 13, %s26
          %s165 = ssub.s32 1664, 1664
          %166 = vsyncadd [#allocation3], %s165
          %s167 = smul.addr %s163, 2
          %s168 = smul.addr %s167, 64
          %s169 = scalar_lea.hbm %s0, %s168
          %s170 = sshll.u32 [#allocation2], 4
          %s171 = int_to_ptr.vmem [resolvable:$true] %s170
          %176 = dma.hbm_to_vmem [thread:$0]  %s169, 1664, %s171, [#allocation3], 128, 128, 8
        $region16: #{tpu_custom_call.1} parent=11 // pred_fallthru
          _
      $region12: #{tpu_custom_call.1} parent=5 // pred_fallthru
        _
      %p177 = scmp.lt.s32.totalorder %s16, 2
      // Predicated region
      $region17: #{tpu_custom_call.1} parent=5 // pred_check
        %p178 = pneg %p177
      $region18: #{tpu_custom_call.1} parent=5 // pred_check_branch
        %180 = sbr.rel (%p178) target = $region20
      $region19: #{tpu_custom_call.1} parent=5 // pred_region
        // Predicated region
        $region21: #{tpu_custom_call.1} parent=19 // pred_check
          %p181 = pneg %p83
        $region22: #{tpu_custom_call.1} parent=19 // pred_check_branch
          %183 = sbr.rel (%p181) target = $region24
        $region23: #{tpu_custom_call.1} parent=19 // pred_region
          %s184 = sand.u32 %s73, 1
          %s185 = scalar_lea.sflag [#allocation6], %s184
          %s186 = sand.u32 %s73, 1
          %s187 = smul.addr %s186, 32
          %s188 = scalar_lea.vmem [#allocation5], %s187
          %s189 = smul.u32 4, %s25
          %s191 = ssub.s32 512, 512
          %192 = vsyncadd %s185, %s191
          %s193 = smul.addr %s189, 2
          %s194 = sadd.s32 %s24, %s193
          %s195 = smul.addr %s194, 128
          %s196 = scalar_lea.hbm %s1, %s195
          %s197 = sshll.u32 %s188, 4
          %s198 = int_to_ptr.vmem [resolvable:$true] %s197
          %203 = dma.hbm_to_vmem [thread:$0]  %s196, 512, %s198, %s185, 256, 128, 8
        $region24: #{tpu_custom_call.1} parent=19 // pred_fallthru
          _
        // Predicated region
        $region25: #{tpu_custom_call.1} parent=19 // pred_check
          %p204 = pneg %p111
        $region26: #{tpu_custom_call.1} parent=19 // pred_check_branch
          %206 = sbr.rel (%p204) target = $region28
        $region27: #{tpu_custom_call.1} parent=19 // pred_region
          %p207 = scmp.lt.s32.totalorder %s25, 0
          %s208 = scalar_select %p207, %s25, 0
          %p209 = scmp.lt.s32.totalorder %s24, 1
          %s210 = scalar_select %p209, %s24, 1
          %s211 = smul.addr %s208, 2
          %s212 = sadd.s32 %s210, %s211
          %s213 = smul.addr %s212, 2
          %s214 = scalar_lea.vmem %s2, %s213
        $region28: #{tpu_custom_call.1} parent=19 // pred_fallthru
          _
      $region20: #{tpu_custom_call.1} parent=5 // pred_fallthru
        _
      %p215 = scmp.le.s32.totalorder 1, %s16
      %p216 = scmp.lt.s32.totalorder %s16, 3
      %p217 = pnand %p215, %p216
      %p218 = pneg %p217
      // Predicated region
      $region29: #{tpu_custom_call.1} parent=5 // pred_check
        _
      $region30: #{tpu_custom_call.1} parent=5 // pred_check_branch
        %220 = sbr.rel (%p217) target = $region32
      $region31: #{tpu_custom_call.1} parent=5 // pred_region
        %s221 = ssub.s32 %s16, 1
        // Predicated region
        $region33: #{tpu_custom_call.1} parent=31 // pred_check
          %p222 = pneg %p61
        $region34: #{tpu_custom_call.1} parent=31 // pred_check_branch
          %224 = sbr.rel (%p222) target = $region36
        $region35: #{tpu_custom_call.1} parent=31 // pred_region
          %225 = dma.done [#allocation3], 1664
        $region36: #{tpu_custom_call.1} parent=31 // pred_fallthru
          _
        %s226 = sand.u32 %s76, 1
        %s227 = scalar_lea.sflag [#allocation6], %s226
        %s228 = sand.u32 %s76, 1
        %s229 = smul.addr %s228, 32
        %s230 = scalar_lea.vmem [#allocation5], %s229
        // Predicated region
        $region37: #{tpu_custom_call.1} parent=31 // pred_check
          %p231 = pneg %p89
        $region38: #{tpu_custom_call.1} parent=31 // pred_check_branch
          %233 = sbr.rel (%p231) target = $region40
        $region39: #{tpu_custom_call.1} parent=31 // pred_region
          %234 = dma.done %s227, 512
        $region40: #{tpu_custom_call.1} parent=31 // pred_fallthru
          _
        %p235 = pneg %p61
        %p236 = pneg %p58
        %s237 = sand.u32 %s76, 1
        %s238 = scalar_lea.sflag [#allocation6], %s237
        %s239 = sand.u32 %s76, 1
        %s240 = smul.addr %s239, 32
        %s241 = scalar_lea.vmem [#allocation5], %s240
        %p242 = pneg %p89
        %p243 = pneg %p86
        %p244 = scmp.lt.s32.totalorder %s28, 0
        %s245 = scalar_select %p244, %s28, 0
        %p246 = scmp.lt.s32.totalorder %s27, 1
        %s247 = scalar_select %p246, %s27, 1
        %s248 = smul.addr %s245, 2
        %s249 = sadd.s32 %s247, %s248
        %s250 = smul.addr %s249, 2
        %s251 = scalar_lea.vmem %s2, %s250
        %p252 = pneg %p117
        %p253 = pneg %p114
        %p254 = pneg %p145
        %p255 = pneg %p142
        %s256 = sand.u32 %s132, 1
        %s257 = scalar_lea.sflag [#allocation4], %s256
        %s258 = sand.u32 %s132, 1
        %s259 = smul.addr %s258, 104
        %s260 = scalar_lea.vmem [#allocation7], %s259
        %s261 = smul.u32 13, %s26
        %s262 = smul.u32 4, %s28
        %p263 = scmp.lt.s32.totalorder %s28, 0
        %s264 = scalar_select %p263, %s28, 0
        %p265 = scmp.lt.s32.totalorder %s27, 1
        %s266 = scalar_select %p265, %s27, 1
        %s267 = smul.addr %s264, 2
        %s268 = sadd.s32 %s266, %s267
        %s269 = smul.addr %s268, 2
        %s270 = scalar_lea.vmem %s2, %s269
        %s271 = smul.u32 13, %s26
        %p273 = scmp.eq.s32.totalorder %s28, 0
        // Predicated region
        $region41: #{tpu_custom_call.1} parent=31 // pred_check
          %p274 = pneg %p273
        $region42: #{tpu_custom_call.1} parent=31 // pred_check_branch
          %276 = sbr.rel (%p274) target = $region44
        $region43: #{tpu_custom_call.1} parent=31 // pred_region
          %277 = vst [vmem:[%s260] sm:$0xff] 0.0
          %278 = vst [vmem:[%s260 + $0x8] sm:$0xff] 0.0
          %279 = vst [vmem:[%s260 + $0x10] sm:$0xff] 0.0
          %280 = vst [vmem:[%s260 + $0x18] sm:$0xff] 0.0
          %281 = vst [vmem:[%s260 + $0x20] sm:$0xff] 0.0
          %282 = vst [vmem:[%s260 + $0x28] sm:$0xff] 0.0
          %283 = vst [vmem:[%s260 + $0x30] sm:$0xff] 0.0
          %284 = vst [vmem:[%s260 + $0x38] sm:$0xff] 0.0
          %285 = vst [vmem:[%s260 + $0x40] sm:$0xff] 0.0
          %286 = vst [vmem:[%s260 + $0x48] sm:$0xff] 0.0
          %287 = vst [vmem:[%s260 + $0x50] sm:$0xff] 0.0
          %288 = vst [vmem:[%s260 + $0x58] sm:$0xff] 0.0
          %289 = vst [vmem:[%s260 + $0x60] sm:$0xff] 0.0
        $region44: #{tpu_custom_call.1} parent=31 // pred_fallthru
          _
        %v290 = vld [vmem:[%s230] sm:$0xff]
        %v291 = vld [vmem:[%s230 + $0x8] sm:$0xff]
        %v292 = vld [vmem:[%s230 + $0x10] sm:$0xff]
        %v293 = vld [vmem:[%s230 + $0x18] sm:$0xff]
        %v294 = vunpack.c.0.s8 %v290
        %v295 = vunpack.c.1.s8 %v290
        %v296 = vunpack.c.2.s8 %v290
        %v297 = vunpack.c.3.s8 %v290
        %v298 = vunpack.c.0.s8 %v291
        %v299 = vunpack.c.1.s8 %v291
        %v300 = vunpack.c.2.s8 %v291
        %v301 = vunpack.c.3.s8 %v291
        %v302 = vunpack.c.0.s8 %v292
        %v303 = vunpack.c.1.s8 %v292
        %v304 = vunpack.c.2.s8 %v292
        %v305 = vunpack.c.3.s8 %v292
        %v306 = vunpack.c.0.s8 %v293
        %v307 = vunpack.c.1.s8 %v293
        %v308 = vunpack.c.2.s8 %v293
        %v309 = vunpack.c.3.s8 %v293
        %v310 = vand.u32 %v294, 255
        %v311 = vand.u32 %v295, 255
        %v312 = vand.u32 %v296, 255
        %v313 = vand.u32 %v297, 255
        %v314 = vand.u32 %v298, 255
        %v315 = vand.u32 %v299, 255
        %v316 = vand.u32 %v300, 255
        %v317 = vand.u32 %v301, 255
        %v318 = vand.u32 %v302, 255
        %v319 = vand.u32 %v303, 255
        %v320 = vand.u32 %v304, 255
        %v321 = vand.u32 %v305, 255
        %v322 = vand.u32 %v306, 255
        %v323 = vand.u32 %v307, 255
        %v324 = vand.u32 %v308, 255
        %v325 = vand.u32 %v309, 255
        %v326 = vld [vmem:[%s270] sm:$0x3]
        %v327 = vand.u32 %v310, 15
        %v328 = vand.u32 %v311, 15
        %v329 = vand.u32 %v312, 15
        %v330 = vand.u32 %v313, 15
        %v331 = vand.u32 %v314, 15
        %v332 = vand.u32 %v315, 15
        %v333 = vand.u32 %v316, 15
        %v334 = vand.u32 %v317, 15
        %v335 = vand.u32 %v318, 15
        %v336 = vand.u32 %v319, 15
        %v337 = vand.u32 %v320, 15
        %v338 = vand.u32 %v321, 15
        %v339 = vand.u32 %v322, 15
        %v340 = vand.u32 %v323, 15
        %v341 = vand.u32 %v324, 15
        %v342 = vand.u32 %v325, 15
        %v343 = vand.u32 %v327, 1
        %v344 = vand.u32 %v328, 1
        %v345 = vand.u32 %v329, 1
        %v346 = vand.u32 %v330, 1
        %v347 = vand.u32 %v331, 1
        %v348 = vand.u32 %v332, 1
        %v349 = vand.u32 %v333, 1
        %v350 = vand.u32 %v334, 1
        %v351 = vand.u32 %v335, 1
        %v352 = vand.u32 %v336, 1
        %v353 = vand.u32 %v337, 1
        %v354 = vand.u32 %v338, 1
        %v355 = vand.u32 %v339, 1
        %v356 = vand.u32 %v340, 1
        %v357 = vand.u32 %v341, 1
        %v358 = vand.u32 %v342, 1
        %vm359 = vcmp.ne.s32.totalorder %v343, 0
        %vm360 = vcmp.ne.s32.totalorder %v344, 0
        %vm361 = vcmp.ne.s32.totalorder %v345, 0
        %vm362 = vcmp.ne.s32.totalorder %v346, 0
        %vm363 = vcmp.ne.s32.totalorder %v347, 0
        %vm364 = vcmp.ne.s32.totalorder %v348, 0
        %vm365 = vcmp.ne.s32.totalorder %v349, 0
        %vm366 = vcmp.ne.s32.totalorder %v350, 0
        %vm367 = vcmp.ne.s32.totalorder %v351, 0
        %vm368 = vcmp.ne.s32.totalorder %v352, 0
        %vm369 = vcmp.ne.s32.totalorder %v353, 0
        %vm370 = vcmp.ne.s32.totalorder %v354, 0
        %vm371 = vcmp.ne.s32.totalorder %v355, 0
        %vm372 = vcmp.ne.s32.totalorder %v356, 0
        %vm373 = vcmp.ne.s32.totalorder %v357, 0
        %vm374 = vcmp.ne.s32.totalorder %v358, 0
        %v375 = vand.u32 %v327, 2
        %v376 = vand.u32 %v328, 2
        %v377 = vand.u32 %v329, 2
        %v378 = vand.u32 %v330, 2
        %v379 = vand.u32 %v331, 2
        %v380 = vand.u32 %v332, 2
        %v381 = vand.u32 %v333, 2
        %v382 = vand.u32 %v334, 2
        %v383 = vand.u32 %v335, 2
        %v384 = vand.u32 %v336, 2
        %v385 = vand.u32 %v337, 2
        %v386 = vand.u32 %v338, 2
        %v387 = vand.u32 %v339, 2
        %v388 = vand.u32 %v340, 2
        %v389 = vand.u32 %v341, 2
        %v390 = vand.u32 %v342, 2
        %vm391 = vcmp.ne.s32.totalorder %v375, 0
        %vm392 = vcmp.ne.s32.totalorder %v376, 0
        %vm393 = vcmp.ne.s32.totalorder %v377, 0
        %vm394 = vcmp.ne.s32.totalorder %v378, 0
        %vm395 = vcmp.ne.s32.totalorder %v379, 0
        %vm396 = vcmp.ne.s32.totalorder %v380, 0
        %vm397 = vcmp.ne.s32.totalorder %v381, 0
        %vm398 = vcmp.ne.s32.totalorder %v382, 0
        %vm399 = vcmp.ne.s32.totalorder %v383, 0
        %vm400 = vcmp.ne.s32.totalorder %v384, 0
        %vm401 = vcmp.ne.s32.totalorder %v385, 0
        %vm402 = vcmp.ne.s32.totalorder %v386, 0
        %vm403 = vcmp.ne.s32.totalorder %v387, 0
        %vm404 = vcmp.ne.s32.totalorder %v388, 0
        %vm405 = vcmp.ne.s32.totalorder %v389, 0
        %vm406 = vcmp.ne.s32.totalorder %v390, 0
        %v407 = vand.u32 %v327, 4
        %v408 = vand.u32 %v328, 4
        %v409 = vand.u32 %v329, 4
        %v410 = vand.u32 %v330, 4
        %v411 = vand.u32 %v331, 4
        %v412 = vand.u32 %v332, 4
        %v413 = vand.u32 %v333, 4
        %v414 = vand.u32 %v334, 4
        %v415 = vand.u32 %v335, 4
        %v416 = vand.u32 %v336, 4
        %v417 = vand.u32 %v337, 4
        %v418 = vand.u32 %v338, 4
        %v419 = vand.u32 %v339, 4
        %v420 = vand.u32 %v340, 4
        %v421 = vand.u32 %v341, 4
        %v422 = vand.u32 %v342, 4
        %vm423 = vcmp.ne.s32.totalorder %v407, 0
        %vm424 = vcmp.ne.s32.totalorder %v408, 0
        %vm425 = vcmp.ne.s32.totalorder %v409, 0
        %vm426 = vcmp.ne.s32.totalorder %v410, 0
        %vm427 = vcmp.ne.s32.totalorder %v411, 0
        %vm428 = vcmp.ne.s32.totalorder %v412, 0
        %vm429 = vcmp.ne.s32.totalorder %v413, 0
        %vm430 = vcmp.ne.s32.totalorder %v414, 0
        %vm431 = vcmp.ne.s32.totalorder %v415, 0
        %vm432 = vcmp.ne.s32.totalorder %v416, 0
        %vm433 = vcmp.ne.s32.totalorder %v417, 0
        %vm434 = vcmp.ne.s32.totalorder %v418, 0
        %vm435 = vcmp.ne.s32.totalorder %v419, 0
        %vm436 = vcmp.ne.s32.totalorder %v420, 0
        %vm437 = vcmp.ne.s32.totalorder %v421, 0
        %vm438 = vcmp.ne.s32.totalorder %v422, 0
        %v439 = vand.u32 %v327, 8
        %v440 = vand.u32 %v328, 8
        %v441 = vand.u32 %v329, 8
        %v442 = vand.u32 %v330, 8
        %v443 = vand.u32 %v331, 8
        %v444 = vand.u32 %v332, 8
        %v445 = vand.u32 %v333, 8
        %v446 = vand.u32 %v334, 8
        %v447 = vand.u32 %v335, 8
        %v448 = vand.u32 %v336, 8
        %v449 = vand.u32 %v337, 8
        %v450 = vand.u32 %v338, 8
        %v451 = vand.u32 %v339, 8
        %v452 = vand.u32 %v340, 8
        %v453 = vand.u32 %v341, 8
        %v454 = vand.u32 %v342, 8
        %vm455 = vcmp.ne.s32.totalorder %v439, 0
        %vm456 = vcmp.ne.s32.totalorder %v440, 0
        %vm457 = vcmp.ne.s32.totalorder %v441, 0
        %vm458 = vcmp.ne.s32.totalorder %v442, 0
        %vm459 = vcmp.ne.s32.totalorder %v443, 0
        %vm460 = vcmp.ne.s32.totalorder %v444, 0
        %vm461 = vcmp.ne.s32.totalorder %v445, 0
        %vm462 = vcmp.ne.s32.totalorder %v446, 0
        %vm463 = vcmp.ne.s32.totalorder %v447, 0
        %vm464 = vcmp.ne.s32.totalorder %v448, 0
        %vm465 = vcmp.ne.s32.totalorder %v449, 0
        %vm466 = vcmp.ne.s32.totalorder %v450, 0
        %vm467 = vcmp.ne.s32.totalorder %v451, 0
        %vm468 = vcmp.ne.s32.totalorder %v452, 0
        %vm469 = vcmp.ne.s32.totalorder %v453, 0
        %vm470 = vcmp.ne.s32.totalorder %v454, 0
        %v471 = vsel %vm359, -0.6961928, -1.0
        %v472 = vsel %vm360, -0.6961928, -1.0
        %v473 = vsel %vm361, -0.6961928, -1.0
        %v474 = vsel %vm362, -0.6961928, -1.0
        %v475 = vsel %vm363, -0.6961928, -1.0
        %v476 = vsel %vm364, -0.6961928, -1.0
        %v477 = vsel %vm365, -0.6961928, -1.0
        %v478 = vsel %vm366, -0.6961928, -1.0
        %v479 = vsel %vm367, -0.6961928, -1.0
        %v480 = vsel %vm368, -0.6961928, -1.0
        %v481 = vsel %vm369, -0.6961928, -1.0
        %v482 = vsel %vm370, -0.6961928, -1.0
        %v483 = vsel %vm371, -0.6961928, -1.0
        %v484 = vsel %vm372, -0.6961928, -1.0
        %v485 = vsel %vm373, -0.6961928, -1.0
        %v486 = vsel %vm374, -0.6961928, -1.0
        %v487 = vsel %vm359, -0.3949175, -0.52507305
        %v488 = vsel %vm360, -0.3949175, -0.52507305
        %v489 = vsel %vm361, -0.3949175, -0.52507305
        %v490 = vsel %vm362, -0.3949175, -0.52507305
        %v491 = vsel %vm363, -0.3949175, -0.52507305
        %v492 = vsel %vm364, -0.3949175, -0.52507305
        %v493 = vsel %vm365, -0.3949175, -0.52507305
        %v494 = vsel %vm366, -0.3949175, -0.52507305
        %v495 = vsel %vm367, -0.3949175, -0.52507305
        %v496 = vsel %vm368, -0.3949175, -0.52507305
        %v497 = vsel %vm369, -0.3949175, -0.52507305
        %v498 = vsel %vm370, -0.3949175, -0.52507305
        %v499 = vsel %vm371, -0.3949175, -0.52507305
        %v500 = vsel %vm372, -0.3949175, -0.52507305
        %v501 = vsel %vm373, -0.3949175, -0.52507305
        %v502 = vsel %vm374, -0.3949175, -0.52507305
        %v503 = vsel %vm359, -0.18477343, -0.28444138
        %v504 = vsel %vm360, -0.18477343, -0.28444138
        %v505 = vsel %vm361, -0.18477343, -0.28444138
        %v506 = vsel %vm362, -0.18477343, -0.28444138
        %v507 = vsel %vm363, -0.18477343, -0.28444138
        %v508 = vsel %vm364, -0.18477343, -0.28444138
        %v509 = vsel %vm365, -0.18477343, -0.28444138
        %v510 = vsel %vm366, -0.18477343, -0.28444138
        %v511 = vsel %vm367, -0.18477343, -0.28444138
        %v512 = vsel %vm368, -0.18477343, -0.28444138
        %v513 = vsel %vm369, -0.18477343, -0.28444138
        %v514 = vsel %vm370, -0.18477343, -0.28444138
        %v515 = vsel %vm371, -0.18477343, -0.28444138
        %v516 = vsel %vm372, -0.18477343, -0.28444138
        %v517 = vsel %vm373, -0.18477343, -0.28444138
        %v518 = vsel %vm374, -0.18477343, -0.28444138
        %v519 = vsel %vm359, 0.0, -0.091050036
        %v520 = vsel %vm360, 0.0, -0.091050036
        %v521 = vsel %vm361, 0.0, -0.091050036
        %v522 = vsel %vm362, 0.0, -0.091050036
        %v523 = vsel %vm363, 0.0, -0.091050036
        %v524 = vsel %vm364, 0.0, -0.091050036
        %v525 = vsel %vm365, 0.0, -0.091050036
        %v526 = vsel %vm366, 0.0, -0.091050036
        %v527 = vsel %vm367, 0.0, -0.091050036
        %v528 = vsel %vm368, 0.0, -0.091050036
        %v529 = vsel %vm369, 0.0, -0.091050036
        %v530 = vsel %vm370, 0.0, -0.091050036
        %v531 = vsel %vm371, 0.0, -0.091050036
        %v532 = vsel %vm372, 0.0, -0.091050036
        %v533 = vsel %vm373, 0.0, -0.091050036
        %v534 = vsel %vm374, 0.0, -0.091050036
        %v535 = vsel %vm359, 0.1609302, 0.0795803
        %v536 = vsel %vm360, 0.1609302, 0.0795803
        %v537 = vsel %vm361, 0.1609302, 0.0795803
        %v538 = vsel %vm362, 0.1609302, 0.0795803
        %v539 = vsel %vm363, 0.1609302, 0.0795803
        %v540 = vsel %vm364, 0.1609302, 0.0795803
        %v541 = vsel %vm365, 0.1609302, 0.0795803
        %v542 = vsel %vm366, 0.1609302, 0.0795803
        %v543 = vsel %vm367, 0.1609302, 0.0795803
        %v544 = vsel %vm368, 0.1609302, 0.0795803
        %v545 = vsel %vm369, 0.1609302, 0.0795803
        %v546 = vsel %vm370, 0.1609302, 0.0795803
        %v547 = vsel %vm371, 0.1609302, 0.0795803
        %v548 = vsel %vm372, 0.1609302, 0.0795803
        %v549 = vsel %vm373, 0.1609302, 0.0795803
        %v550 = vsel %vm374, 0.1609302, 0.0795803
        %v551 = vsel %vm359, 0.33791524, 0.2461123
        %v552 = vsel %vm360, 0.33791524, 0.2461123
        %v553 = vsel %vm361, 0.33791524, 0.2461123
        %v554 = vsel %vm362, 0.33791524, 0.2461123
        %v555 = vsel %vm363, 0.33791524, 0.2461123
        %v556 = vsel %vm364, 0.33791524, 0.2461123
        %v557 = vsel %vm365, 0.33791524, 0.2461123
        %v558 = vsel %vm366, 0.33791524, 0.2461123
        %v559 = vsel %vm367, 0.33791524, 0.2461123
        %v560 = vsel %vm368, 0.33791524, 0.2461123
        %v561 = vsel %vm369, 0.33791524, 0.2461123
        %v562 = vsel %vm370, 0.33791524, 0.2461123
        %v563 = vsel %vm371, 0.33791524, 0.2461123
        %v564 = vsel %vm372, 0.33791524, 0.2461123
        %v565 = vsel %vm373, 0.33791524, 0.2461123
        %v566 = vsel %vm374, 0.33791524, 0.2461123
        %v567 = vsel %vm359, 0.562617, 0.44070983
        %v568 = vsel %vm360, 0.562617, 0.44070983
        %v569 = vsel %vm361, 0.562617, 0.44070983
        %v570 = vsel %vm362, 0.562617, 0.44070983
        %v571 = vsel %vm363, 0.562617, 0.44070983
        %v572 = vsel %vm364, 0.562617, 0.44070983
        %v573 = vsel %vm365, 0.562617, 0.44070983
        %v574 = vsel %vm366, 0.562617, 0.44070983
        %v575 = vsel %vm367, 0.562617, 0.44070983
        %v576 = vsel %vm368, 0.562617, 0.44070983
        %v577 = vsel %vm369, 0.562617, 0.44070983
        %v578 = vsel %vm370, 0.562617, 0.44070983
        %v579 = vsel %vm371, 0.562617, 0.44070983
        %v580 = vsel %vm372, 0.562617, 0.44070983
        %v581 = vsel %vm373, 0.562617, 0.44070983
        %v582 = vsel %vm374, 0.562617, 0.44070983
        %v583 = vsel %vm359, 1.0, 0.72295684
        %v584 = vsel %vm360, 1.0, 0.72295684
        %v585 = vsel %vm361, 1.0, 0.72295684
        %v586 = vsel %vm362, 1.0, 0.72295684
        %v587 = vsel %vm363, 1.0, 0.72295684
        %v588 = vsel %vm364, 1.0, 0.72295684
        %v589 = vsel %vm365, 1.0, 0.72295684
        %v590 = vsel %vm366, 1.0, 0.72295684
        %v591 = vsel %vm367, 1.0, 0.72295684
        %v592 = vsel %vm368, 1.0, 0.72295684
        %v593 = vsel %vm369, 1.0, 0.72295684
        %v594 = vsel %vm370, 1.0, 0.72295684
        %v595 = vsel %vm371, 1.0, 0.72295684
        %v596 = vsel %vm372, 1.0, 0.72295684
        %v597 = vsel %vm373, 1.0, 0.72295684
        %v598 = vsel %vm374, 1.0, 0.72295684
        %v599 = vsel %vm391, %v487, %v471
        %v600 = vsel %vm392, %v488, %v472
        %v601 = vsel %vm393, %v489, %v473
        %v602 = vsel %vm394, %v490, %v474
        %v603 = vsel %vm395, %v491, %v475
        %v604 = vsel %vm396, %v492, %v476
        %v605 = vsel %vm397, %v493, %v477
        %v606 = vsel %vm398, %v494, %v478
        %v607 = vsel %vm399, %v495, %v479
        %v608 = vsel %vm400, %v496, %v480
        %v609 = vsel %vm401, %v497, %v481
        %v610 = vsel %vm402, %v498, %v482
        %v611 = vsel %vm403, %v499, %v483
        %v612 = vsel %vm404, %v500, %v484
        %v613 = vsel %vm405, %v501, %v485
        %v614 = vsel %vm406, %v502, %v486
        %v615 = vsel %vm391, %v519, %v503
        %v616 = vsel %vm392, %v520, %v504
        %v617 = vsel %vm393, %v521, %v505
        %v618 = vsel %vm394, %v522, %v506
        %v619 = vsel %vm395, %v523, %v507
        %v620 = vsel %vm396, %v524, %v508
        %v621 = vsel %vm397, %v525, %v509
        %v622 = vsel %vm398, %v526, %v510
        %v623 = vsel %vm399, %v527, %v511
        %v624 = vsel %vm400, %v528, %v512
        %v625 = vsel %vm401, %v529, %v513
        %v626 = vsel %vm402, %v530, %v514
        %v627 = vsel %vm403, %v531, %v515
        %v628 = vsel %vm404, %v532, %v516
        %v629 = vsel %vm405, %v533, %v517
        %v630 = vsel %vm406, %v534, %v518
        %v631 = vsel %vm391, %v551, %v535
        %v632 = vsel %vm392, %v552, %v536
        %v633 = vsel %vm393, %v553, %v537
        %v634 = vsel %vm394, %v554, %v538
        %v635 = vsel %vm395, %v555, %v539
        %v636 = vsel %vm396, %v556, %v540
        %v637 = vsel %vm397, %v557, %v541
        %v638 = vsel %vm398, %v558, %v542
        %v639 = vsel %vm399, %v559, %v543
        %v640 = vsel %vm400, %v560, %v544
        %v641 = vsel %vm401, %v561, %v545
        %v642 = vsel %vm402, %v562, %v546
        %v643 = vsel %vm403, %v563, %v547
        %v644 = vsel %vm404, %v564, %v548
        %v645 = vsel %vm405, %v565, %v549
        %v646 = vsel %vm406, %v566, %v550
        %v647 = vsel %vm391, %v583, %v567
        %v648 = vsel %vm392, %v584, %v568
        %v649 = vsel %vm393, %v585, %v569
        %v650 = vsel %vm394, %v586, %v570
        %v651 = vsel %vm395, %v587, %v571
        %v652 = vsel %vm396, %v588, %v572
        %v653 = vsel %vm397, %v589, %v573
        %v654 = vsel %vm398, %v590, %v574
        %v655 = vsel %vm399, %v591, %v575
        %v656 = vsel %vm400, %v592, %v576
        %v657 = vsel %vm401, %v593, %v577
        %v658 = vsel %vm402, %v594, %v578
        %v659 = vsel %vm403, %v595, %v579
        %v660 = vsel %vm404, %v596, %v580
        %v661 = vsel %vm405, %v597, %v581
        %v662 = vsel %vm406, %v598, %v582
        %v663 = vsel %vm423, %v615, %v599
        %v664 = vsel %vm424, %v616, %v600
        %v665 = vsel %vm425, %v617, %v601
        %v666 = vsel %vm426, %v618, %v602
        %v667 = vsel %vm427, %v619, %v603
        %v668 = vsel %vm428, %v620, %v604
        %v669 = vsel %vm429, %v621, %v605
        %v670 = vsel %vm430, %v622, %v606
        %v671 = vsel %vm431, %v623, %v607
        %v672 = vsel %vm432, %v624, %v608
        %v673 = vsel %vm433, %v625, %v609
        %v674 = vsel %vm434, %v626, %v610
        %v675 = vsel %vm435, %v627, %v611
        %v676 = vsel %vm436, %v628, %v612
        %v677 = vsel %vm437, %v629, %v613
        %v678 = vsel %vm438, %v630, %v614
        %v679 = vsel %vm423, %v647, %v631
        %v680 = vsel %vm424, %v648, %v632
        %v681 = vsel %vm425, %v649, %v633
        %v682 = vsel %vm426, %v650, %v634
        %v683 = vsel %vm427, %v651, %v635
        %v684 = vsel %vm428, %v652, %v636
        %v685 = vsel %vm429, %v653, %v637
        %v686 = vsel %vm430, %v654, %v638
        %v687 = vsel %vm431, %v655, %v639
        %v688 = vsel %vm432, %v656, %v640
        %v689 = vsel %vm433, %v657, %v641
        %v690 = vsel %vm434, %v658, %v642
        %v691 = vsel %vm435, %v659, %v643
        %v692 = vsel %vm436, %v660, %v644
        %v693 = vsel %vm437, %v661, %v645
        %v694 = vsel %vm438, %v662, %v646
        %v695 = vsel %vm455, %v679, %v663
        %v696 = vsel %vm456, %v680, %v664
        %v697 = vsel %vm457, %v681, %v665
        %v698 = vsel %vm458, %v682, %v666
        %v699 = vsel %vm459, %v683, %v667
        %v700 = vsel %vm460, %v684, %v668
        %v701 = vsel %vm461, %v685, %v669
        %v702 = vsel %vm462, %v686, %v670
        %v703 = vsel %vm463, %v687, %v671
        %v704 = vsel %vm464, %v688, %v672
        %v705 = vsel %vm465, %v689, %v673
        %v706 = vsel %vm466, %v690, %v674
        %v707 = vsel %vm467, %v691, %v675
        %v708 = vsel %vm468, %v692, %v676
        %v709 = vsel %vm469, %v693, %v677
        %v710 = vsel %vm470, %v694, %v678
        %v711 = vlaneseq
        %v712 = vshrl.u32 %v711, 7
        %v713 = vsub.s32 0, %v712
        %v714 = vrot.slane %v326, %v713
        %v715 = vmul.f32 %v695, %v714
        %v716 = vmul.f32 %v696, %v714
        %v717 = vmul.f32 %v697, %v714
        %v718 = vmul.f32 %v698, %v714
        %v719 = vmul.f32 %v699, %v714
        %v720 = vmul.f32 %v700, %v714
        %v721 = vmul.f32 %v701, %v714
        %v722 = vmul.f32 %v702, %v714
        %v723 = vmul.f32 %v703, %v714
        %v724 = vmul.f32 %v704, %v714
        %v725 = vmul.f32 %v705, %v714
        %v726 = vmul.f32 %v706, %v714
        %v727 = vmul.f32 %v707, %v714
        %v728 = vmul.f32 %v708, %v714
        %v729 = vmul.f32 %v709, %v714
        %v730 = vmul.f32 %v710, %v714
        %v731 = vshra.s32 %v310, 4
        %v732 = vshra.s32 %v311, 4
        %v733 = vshra.s32 %v312, 4
        %v734 = vshra.s32 %v313, 4
        %v735 = vshra.s32 %v314, 4
        %v736 = vshra.s32 %v315, 4
        %v737 = vshra.s32 %v316, 4
        %v738 = vshra.s32 %v317, 4
        %v739 = vshra.s32 %v318, 4
        %v740 = vshra.s32 %v319, 4
        %v741 = vshra.s32 %v320, 4
        %v742 = vshra.s32 %v321, 4
        %v743 = vshra.s32 %v322, 4
        %v744 = vshra.s32 %v323, 4
        %v745 = vshra.s32 %v324, 4
        %v746 = vshra.s32 %v325, 4
        %v747 = vand.u32 %v731, 1
        %v748 = vand.u32 %v732, 1
        %v749 = vand.u32 %v733, 1
        %v750 = vand.u32 %v734, 1
        %v751 = vand.u32 %v735, 1
        %v752 = vand.u32 %v736, 1
        %v753 = vand.u32 %v737, 1
        %v754 = vand.u32 %v738, 1
        %v755 = vand.u32 %v739, 1
        %v756 = vand.u32 %v740, 1
        %v757 = vand.u32 %v741, 1
        %v758 = vand.u32 %v742, 1
        %v759 = vand.u32 %v743, 1
        %v760 = vand.u32 %v744, 1
        %v761 = vand.u32 %v745, 1
        %v762 = vand.u32 %v746, 1
        %vm763 = vcmp.ne.s32.totalorder %v747, 0
        %vm764 = vcmp.ne.s32.totalorder %v748, 0
        %vm765 = vcmp.ne.s32.totalorder %v749, 0
        %vm766 = vcmp.ne.s32.totalorder %v750, 0
        %vm767 = vcmp.ne.s32.totalorder %v751, 0
        %vm768 = vcmp.ne.s32.totalorder %v752, 0
        %vm769 = vcmp.ne.s32.totalorder %v753, 0
        %vm770 = vcmp.ne.s32.totalorder %v754, 0
        %vm771 = vcmp.ne.s32.totalorder %v755, 0
        %vm772 = vcmp.ne.s32.totalorder %v756, 0
        %vm773 = vcmp.ne.s32.totalorder %v757, 0
        %vm774 = vcmp.ne.s32.totalorder %v758, 0
        %vm775 = vcmp.ne.s32.totalorder %v759, 0
        %vm776 = vcmp.ne.s32.totalorder %v760, 0
        %vm777 = vcmp.ne.s32.totalorder %v761, 0
        %vm778 = vcmp.ne.s32.totalorder %v762, 0
        %v779 = vand.u32 %v731, 2
        %v780 = vand.u32 %v732, 2
        %v781 = vand.u32 %v733, 2
        %v782 = vand.u32 %v734, 2
        %v783 = vand.u32 %v735, 2
        %v784 = vand.u32 %v736, 2
        %v785 = vand.u32 %v737, 2
        %v786 = vand.u32 %v738, 2
        %v787 = vand.u32 %v739, 2
        %v788 = vand.u32 %v740, 2
        %v789 = vand.u32 %v741, 2
        %v790 = vand.u32 %v742, 2
        %v791 = vand.u32 %v743, 2
        %v792 = vand.u32 %v744, 2
        %v793 = vand.u32 %v745, 2
        %v794 = vand.u32 %v746, 2
        %vm795 = vcmp.ne.s32.totalorder %v779, 0
        %vm796 = vcmp.ne.s32.totalorder %v780, 0
        %vm797 = vcmp.ne.s32.totalorder %v781, 0
        %vm798 = vcmp.ne.s32.totalorder %v782, 0
        %vm799 = vcmp.ne.s32.totalorder %v783, 0
        %vm800 = vcmp.ne.s32.totalorder %v784, 0
        %vm801 = vcmp.ne.s32.totalorder %v785, 0
        %vm802 = vcmp.ne.s32.totalorder %v786, 0
        %vm803 = vcmp.ne.s32.totalorder %v787, 0
        %vm804 = vcmp.ne.s32.totalorder %v788, 0
        %vm805 = vcmp.ne.s32.totalorder %v789, 0
        %vm806 = vcmp.ne.s32.totalorder %v790, 0
        %vm807 = vcmp.ne.s32.totalorder %v791, 0
        %vm808 = vcmp.ne.s32.totalorder %v792, 0
        %vm809 = vcmp.ne.s32.totalorder %v793, 0
        %vm810 = vcmp.ne.s32.totalorder %v794, 0
        %v811 = vand.u32 %v731, 4
        %v812 = vand.u32 %v732, 4
        %v813 = vand.u32 %v733, 4
        %v814 = vand.u32 %v734, 4
        %v815 = vand.u32 %v735, 4
        %v816 = vand.u32 %v736, 4
        %v817 = vand.u32 %v737, 4
        %v818 = vand.u32 %v738, 4
        %v819 = vand.u32 %v739, 4
        %v820 = vand.u32 %v740, 4
        %v821 = vand.u32 %v741, 4
        %v822 = vand.u32 %v742, 4
        %v823 = vand.u32 %v743, 4
        %v824 = vand.u32 %v744, 4
        %v825 = vand.u32 %v745, 4
        %v826 = vand.u32 %v746, 4
        %vm827 = vcmp.ne.s32.totalorder %v811, 0
        %vm828 = vcmp.ne.s32.totalorder %v812, 0
        %vm829 = vcmp.ne.s32.totalorder %v813, 0
        %vm830 = vcmp.ne.s32.totalorder %v814, 0
        %vm831 = vcmp.ne.s32.totalorder %v815, 0
        %vm832 = vcmp.ne.s32.totalorder %v816, 0
        %vm833 = vcmp.ne.s32.totalorder %v817, 0
        %vm834 = vcmp.ne.s32.totalorder %v818, 0
        %vm835 = vcmp.ne.s32.totalorder %v819, 0
        %vm836 = vcmp.ne.s32.totalorder %v820, 0
        %vm837 = vcmp.ne.s32.totalorder %v821, 0
        %vm838 = vcmp.ne.s32.totalorder %v822, 0
        %vm839 = vcmp.ne.s32.totalorder %v823, 0
        %vm840 = vcmp.ne.s32.totalorder %v824, 0
        %vm841 = vcmp.ne.s32.totalorder %v825, 0
        %vm842 = vcmp.ne.s32.totalorder %v826, 0
        %v843 = vand.u32 %v731, 8
        %v844 = vand.u32 %v732, 8
        %v845 = vand.u32 %v733, 8
        %v846 = vand.u32 %v734, 8
        %v847 = vand.u32 %v735, 8
        %v848 = vand.u32 %v736, 8
        %v849 = vand.u32 %v737, 8
        %v850 = vand.u32 %v738, 8
        %v851 = vand.u32 %v739, 8
        %v852 = vand.u32 %v740, 8
        %v853 = vand.u32 %v741, 8
        %v854 = vand.u32 %v742, 8
        %v855 = vand.u32 %v743, 8
        %v856 = vand.u32 %v744, 8
        %v857 = vand.u32 %v745, 8
        %v858 = vand.u32 %v746, 8
        %vm859 = vcmp.ne.s32.totalorder %v843, 0
        %vm860 = vcmp.ne.s32.totalorder %v844, 0
        %vm861 = vcmp.ne.s32.totalorder %v845, 0
        %vm862 = vcmp.ne.s32.totalorder %v846, 0
        %vm863 = vcmp.ne.s32.totalorder %v847, 0
        %vm864 = vcmp.ne.s32.totalorder %v848, 0
        %vm865 = vcmp.ne.s32.totalorder %v849, 0
        %vm866 = vcmp.ne.s32.totalorder %v850, 0
        %vm867 = vcmp.ne.s32.totalorder %v851, 0
        %vm868 = vcmp.ne.s32.totalorder %v852, 0
        %vm869 = vcmp.ne.s32.totalorder %v853, 0
        %vm870 = vcmp.ne.s32.totalorder %v854, 0
        %vm871 = vcmp.ne.s32.totalorder %v855, 0
        %vm872 = vcmp.ne.s32.totalorder %v856, 0
        %vm873 = vcmp.ne.s32.totalorder %v857, 0
        %vm874 = vcmp.ne.s32.totalorder %v858, 0
        %v875 = vsel %vm763, -0.6961928, -1.0
        %v876 = vsel %vm764, -0.6961928, -1.0
        %v877 = vsel %vm765, -0.6961928, -1.0
        %v878 = vsel %vm766, -0.6961928, -1.0
        %v879 = vsel %vm767, -0.6961928, -1.0
        %v880 = vsel %vm768, -0.6961928, -1.0
        %v881 = vsel %vm769, -0.6961928, -1.0
        %v882 = vsel %vm770, -0.6961928, -1.0
        %v883 = vsel %vm771, -0.6961928, -1.0
        %v884 = vsel %vm772, -0.6961928, -1.0
        %v885 = vsel %vm773, -0.6961928, -1.0
        %v886 = vsel %vm774, -0.6961928, -1.0
        %v887 = vsel %vm775, -0.6961928, -1.0
        %v888 = vsel %vm776, -0.6961928, -1.0
        %v889 = vsel %vm777, -0.6961928, -1.0
        %v890 = vsel %vm778, -0.6961928, -1.0
        %v891 = vsel %vm763, -0.3949175, -0.52507305
        %v892 = vsel %vm764, -0.3949175, -0.52507305
        %v893 = vsel %vm765, -0.3949175, -0.52507305
        %v894 = vsel %vm766, -0.3949175, -0.52507305
        %v895 = vsel %vm767, -0.3949175, -0.52507305
        %v896 = vsel %vm768, -0.3949175, -0.52507305
        %v897 = vsel %vm769, -0.3949175, -0.52507305
        %v898 = vsel %vm770, -0.3949175, -0.52507305
        %v899 = vsel %vm771, -0.3949175, -0.52507305
        %v900 = vsel %vm772, -0.3949175, -0.52507305
        %v901 = vsel %vm773, -0.3949175, -0.52507305
        %v902 = vsel %vm774, -0.3949175, -0.52507305
        %v903 = vsel %vm775, -0.3949175, -0.52507305
        %v904 = vsel %vm776, -0.3949175, -0.52507305
        %v905 = vsel %vm777, -0.3949175, -0.52507305
        %v906 = vsel %vm778, -0.3949175, -0.52507305
        %v907 = vsel %vm763, -0.18477343, -0.28444138
        %v908 = vsel %vm764, -0.18477343, -0.28444138
        %v909 = vsel %vm765, -0.18477343, -0.28444138
        %v910 = vsel %vm766, -0.18477343, -0.28444138
        %v911 = vsel %vm767, -0.18477343, -0.28444138
        %v912 = vsel %vm768, -0.18477343, -0.28444138
        %v913 = vsel %vm769, -0.18477343, -0.28444138
        %v914 = vsel %vm770, -0.18477343, -0.28444138
        %v915 = vsel %vm771, -0.18477343, -0.28444138
        %v916 = vsel %vm772, -0.18477343, -0.28444138
        %v917 = vsel %vm773, -0.18477343, -0.28444138
        %v918 = vsel %vm774, -0.18477343, -0.28444138
        %v919 = vsel %vm775, -0.18477343, -0.28444138
        %v920 = vsel %vm776, -0.18477343, -0.28444138
        %v921 = vsel %vm777, -0.18477343, -0.28444138
        %v922 = vsel %vm778, -0.18477343, -0.28444138
        %v923 = vsel %vm763, 0.0, -0.091050036
        %v924 = vsel %vm764, 0.0, -0.091050036
        %v925 = vsel %vm765, 0.0, -0.091050036
        %v926 = vsel %vm766, 0.0, -0.091050036
        %v927 = vsel %vm767, 0.0, -0.091050036
        %v928 = vsel %vm768, 0.0, -0.091050036
        %v929 = vsel %vm769, 0.0, -0.091050036
        %v930 = vsel %vm770, 0.0, -0.091050036
        %v931 = vsel %vm771, 0.0, -0.091050036
        %v932 = vsel %vm772, 0.0, -0.091050036
        %v933 = vsel %vm773, 0.0, -0.091050036
        %v934 = vsel %vm774, 0.0, -0.091050036
        %v935 = vsel %vm775, 0.0, -0.091050036
        %v936 = vsel %vm776, 0.0, -0.091050036
        %v937 = vsel %vm777, 0.0, -0.091050036
        %v938 = vsel %vm778, 0.0, -0.091050036
        %v939 = vsel %vm763, 0.1609302, 0.0795803
        %v940 = vsel %vm764, 0.1609302, 0.0795803
        %v941 = vsel %vm765, 0.1609302, 0.0795803
        %v942 = vsel %vm766, 0.1609302, 0.0795803
        %v943 = vsel %vm767, 0.1609302, 0.0795803
        %v944 = vsel %vm768, 0.1609302, 0.0795803
        %v945 = vsel %vm769, 0.1609302, 0.0795803
        %v946 = vsel %vm770, 0.1609302, 0.0795803
        %v947 = vsel %vm771, 0.1609302, 0.0795803
        %v948 = vsel %vm772, 0.1609302, 0.0795803
        %v949 = vsel %vm773, 0.1609302, 0.0795803
        %v950 = vsel %vm774, 0.1609302, 0.0795803
        %v951 = vsel %vm775, 0.1609302, 0.0795803
        %v952 = vsel %vm776, 0.1609302, 0.0795803
        %v953 = vsel %vm777, 0.1609302, 0.0795803
        %v954 = vsel %vm778, 0.1609302, 0.0795803
        %v955 = vsel %vm763, 0.33791524, 0.2461123
        %v956 = vsel %vm764, 0.33791524, 0.2461123
        %v957 = vsel %vm765, 0.33791524, 0.2461123
        %v958 = vsel %vm766, 0.33791524, 0.2461123
        %v959 = vsel %vm767, 0.33791524, 0.2461123
        %v960 = vsel %vm768, 0.33791524, 0.2461123
        %v961 = vsel %vm769, 0.33791524, 0.2461123
        %v962 = vsel %vm770, 0.33791524, 0.2461123
        %v963 = vsel %vm771, 0.33791524, 0.2461123
        %v964 = vsel %vm772, 0.33791524, 0.2461123
        %v965 = vsel %vm773, 0.33791524, 0.2461123
        %v966 = vsel %vm774, 0.33791524, 0.2461123
        %v967 = vsel %vm775, 0.33791524, 0.2461123
        %v968 = vsel %vm776, 0.33791524, 0.2461123
        %v969 = vsel %vm777, 0.33791524, 0.2461123
        %v970 = vsel %vm778, 0.33791524, 0.2461123
        %v971 = vsel %vm763, 0.562617, 0.44070983
        %v972 = vsel %vm764, 0.562617, 0.44070983
        %v973 = vsel %vm765, 0.562617, 0.44070983
        %v974 = vsel %vm766, 0.562617, 0.44070983
        %v975 = vsel %vm767, 0.562617, 0.44070983
        %v976 = vsel %vm768, 0.562617, 0.44070983
        %v977 = vsel %vm769, 0.562617, 0.44070983
        %v978 = vsel %vm770, 0.562617, 0.44070983
        %v979 = vsel %vm771, 0.562617, 0.44070983
        %v980 = vsel %vm772, 0.562617, 0.44070983
        %v981 = vsel %vm773, 0.562617, 0.44070983
        %v982 = vsel %vm774, 0.562617, 0.44070983
        %v983 = vsel %vm775, 0.562617, 0.44070983
        %v984 = vsel %vm776, 0.562617, 0.44070983
        %v985 = vsel %vm777, 0.562617, 0.44070983
        %v986 = vsel %vm778, 0.562617, 0.44070983
        %v987 = vsel %vm763, 1.0, 0.72295684
        %v988 = vsel %vm764, 1.0, 0.72295684
        %v989 = vsel %vm765, 1.0, 0.72295684
        %v990 = vsel %vm766, 1.0, 0.72295684
        %v991 = vsel %vm767, 1.0, 0.72295684
        %v992 = vsel %vm768, 1.0, 0.72295684
        %v993 = vsel %vm769, 1.0, 0.72295684
        %v994 = vsel %vm770, 1.0, 0.72295684
        %v995 = vsel %vm771, 1.0, 0.72295684
        %v996 = vsel %vm772, 1.0, 0.72295684
        %v997 = vsel %vm773, 1.0, 0.72295684
        %v998 = vsel %vm774, 1.0, 0.72295684
        %v999 = vsel %vm775, 1.0, 0.72295684
        %v1000 = vsel %vm776, 1.0, 0.72295684
        %v1001 = vsel %vm777, 1.0, 0.72295684
        %v1002 = vsel %vm778, 1.0, 0.72295684
        %v1003 = vsel %vm795, %v891, %v875
        %v1004 = vsel %vm796, %v892, %v876
        %v1005 = vsel %vm797, %v893, %v877
        %v1006 = vsel %vm798, %v894, %v878
        %v1007 = vsel %vm799, %v895, %v879
        %v1008 = vsel %vm800, %v896, %v880
        %v1009 = vsel %vm801, %v897, %v881
        %v1010 = vsel %vm802, %v898, %v882
        %v1011 = vsel %vm803, %v899, %v883
        %v1012 = vsel %vm804, %v900, %v884
        %v1013 = vsel %vm805, %v901, %v885
        %v1014 = vsel %vm806, %v902, %v886
        %v1015 = vsel %vm807, %v903, %v887
        %v1016 = vsel %vm808, %v904, %v888
        %v1017 = vsel %vm809, %v905, %v889
        %v1018 = vsel %vm810, %v906, %v890
        %v1019 = vsel %vm795, %v923, %v907
        %v1020 = vsel %vm796, %v924, %v908
        %v1021 = vsel %vm797, %v925, %v909
        %v1022 = vsel %vm798, %v926, %v910
        %v1023 = vsel %vm799, %v927, %v911
        %v1024 = vsel %vm800, %v928, %v912
        %v1025 = vsel %vm801, %v929, %v913
        %v1026 = vsel %vm802, %v930, %v914
        %v1027 = vsel %vm803, %v931, %v915
        %v1028 = vsel %vm804, %v932, %v916
        %v1029 = vsel %vm805, %v933, %v917
        %v1030 = vsel %vm806, %v934, %v918
        %v1031 = vsel %vm807, %v935, %v919
        %v1032 = vsel %vm808, %v936, %v920
        %v1033 = vsel %vm809, %v937, %v921
        %v1034 = vsel %vm810, %v938, %v922
        %v1035 = vsel %vm795, %v955, %v939
        %v1036 = vsel %vm796, %v956, %v940
        %v1037 = vsel %vm797, %v957, %v941
        %v1038 = vsel %vm798, %v958, %v942
        %v1039 = vsel %vm799, %v959, %v943
        %v1040 = vsel %vm800, %v960, %v944
        %v1041 = vsel %vm801, %v961, %v945
        %v1042 = vsel %vm802, %v962, %v946
        %v1043 = vsel %vm803, %v963, %v947
        %v1044 = vsel %vm804, %v964, %v948
        %v1045 = vsel %vm805, %v965, %v949
        %v1046 = vsel %vm806, %v966, %v950
        %v1047 = vsel %vm807, %v967, %v951
        %v1048 = vsel %vm808, %v968, %v952
        %v1049 = vsel %vm809, %v969, %v953
        %v1050 = vsel %vm810, %v970, %v954
        %v1051 = vsel %vm795, %v987, %v971
        %v1052 = vsel %vm796, %v988, %v972
        %v1053 = vsel %vm797, %v989, %v973
        %v1054 = vsel %vm798, %v990, %v974
        %v1055 = vsel %vm799, %v991, %v975
        %v1056 = vsel %vm800, %v992, %v976
        %v1057 = vsel %vm801, %v993, %v977
        %v1058 = vsel %vm802, %v994, %v978
        %v1059 = vsel %vm803, %v995, %v979
        %v1060 = vsel %vm804, %v996, %v980
        %v1061 = vsel %vm805, %v997, %v981
        %v1062 = vsel %vm806, %v998, %v982
        %v1063 = vsel %vm807, %v999, %v983
        %v1064 = vsel %vm808, %v1000, %v984
        %v1065 = vsel %vm809, %v1001, %v985
        %v1066 = vsel %vm810, %v1002, %v986
        %v1067 = vsel %vm827, %v1019, %v1003
        %v1068 = vsel %vm828, %v1020, %v1004
        %v1069 = vsel %vm829, %v1021, %v1005
        %v1070 = vsel %vm830, %v1022, %v1006
        %v1071 = vsel %vm831, %v1023, %v1007
        %v1072 = vsel %vm832, %v1024, %v1008
        %v1073 = vsel %vm833, %v1025, %v1009
        %v1074 = vsel %vm834, %v1026, %v1010
        %v1075 = vsel %vm835, %v1027, %v1011
        %v1076 = vsel %vm836, %v1028, %v1012
        %v1077 = vsel %vm837, %v1029, %v1013
        %v1078 = vsel %vm838, %v1030, %v1014
        %v1079 = vsel %vm839, %v1031, %v1015
        %v1080 = vsel %vm840, %v1032, %v1016
        %v1081 = vsel %vm841, %v1033, %v1017
        %v1082 = vsel %vm842, %v1034, %v1018
        %v1083 = vsel %vm827, %v1051, %v1035
        %v1084 = vsel %vm828, %v1052, %v1036
        %v1085 = vsel %vm829, %v1053, %v1037
        %v1086 = vsel %vm830, %v1054, %v1038
        %v1087 = vsel %vm831, %v1055, %v1039
        %v1088 = vsel %vm832, %v1056, %v1040
        %v1089 = vsel %vm833, %v1057, %v1041
        %v1090 = vsel %vm834, %v1058, %v1042
        %v1091 = vsel %vm835, %v1059, %v1043
        %v1092 = vsel %vm836, %v1060, %v1044
        %v1093 = vsel %vm837, %v1061, %v1045
        %v1094 = vsel %vm838, %v1062, %v1046
        %v1095 = vsel %vm839, %v1063, %v1047
        %v1096 = vsel %vm840, %v1064, %v1048
        %v1097 = vsel %vm841, %v1065, %v1049
        %v1098 = vsel %vm842, %v1066, %v1050
        %v1099 = vsel %vm859, %v1083, %v1067
        %v1100 = vsel %vm860, %v1084, %v1068
        %v1101 = vsel %vm861, %v1085, %v1069
        %v1102 = vsel %vm862, %v1086, %v1070
        %v1103 = vsel %vm863, %v1087, %v1071
        %v1104 = vsel %vm864, %v1088, %v1072
        %v1105 = vsel %vm865, %v1089, %v1073
        %v1106 = vsel %vm866, %v1090, %v1074
        %v1107 = vsel %vm867, %v1091, %v1075
        %v1108 = vsel %vm868, %v1092, %v1076
        %v1109 = vsel %vm869, %v1093, %v1077
        %v1110 = vsel %vm870, %v1094, %v1078
        %v1111 = vsel %vm871, %v1095, %v1079
        %v1112 = vsel %vm872, %v1096, %v1080
        %v1113 = vsel %vm873, %v1097, %v1081
        %v1114 = vsel %vm874, %v1098, %v1082
        %v1115 = vlaneseq
        %v1116 = vshrl.u32 %v1115, 7
        %v1117 = vsub.s32 1, %v1116
        %v1118 = vrot.slane %v326, %v1117
        %v1119 = vmul.f32 %v1099, %v1118
        %v1120 = vmul.f32 %v1100, %v1118
        %v1121 = vmul.f32 %v1101, %v1118
        %v1122 = vmul.f32 %v1102, %v1118
        %v1123 = vmul.f32 %v1103, %v1118
        %v1124 = vmul.f32 %v1104, %v1118
        %v1125 = vmul.f32 %v1105, %v1118
        %v1126 = vmul.f32 %v1106, %v1118
        %v1127 = vmul.f32 %v1107, %v1118
        %v1128 = vmul.f32 %v1108, %v1118
        %v1129 = vmul.f32 %v1109, %v1118
        %v1130 = vmul.f32 %v1110, %v1118
        %v1131 = vmul.f32 %v1111, %v1118
        %v1132 = vmul.f32 %v1112, %v1118
        %v1133 = vmul.f32 %v1113, %v1118
        %v1134 = vmul.f32 %v1114, %v1118
        %v1135 = vpack.c.bf16 %v716, %v715
        %v1136 = vpack.c.bf16 %v718, %v717
        %v1137 = vpack.c.bf16 %v720, %v719
        %v1138 = vpack.c.bf16 %v722, %v721
        %v1139 = vpack.c.bf16 %v724, %v723
        %v1140 = vpack.c.bf16 %v726, %v725
        %v1141 = vpack.c.bf16 %v728, %v727
        %v1142 = vpack.c.bf16 %v730, %v729
        %v1143 = vpack.c.bf16 %v1120, %v1119
        %v1144 = vpack.c.bf16 %v1122, %v1121
        %v1145 = vpack.c.bf16 %v1124, %v1123
        %v1146 = vpack.c.bf16 %v1126, %v1125
        %v1147 = vpack.c.bf16 %v1128, %v1127
        %v1148 = vpack.c.bf16 %v1130, %v1129
        %v1149 = vpack.c.bf16 %v1132, %v1131
        %v1150 = vpack.c.bf16 %v1134, %v1133
        %s1151 = smul.u32 %s28, 26
        %s1152 = smul.addr %s1151, 4
        %s1153 = scalar_lea.vmem [#allocation2], %s1152
        %v1154 = vld [vmem:[%s1153] sm:$0xff]
        %v1155 = vld [vmem:[%s1153 + $0x8] sm:$0xff]
        %v1156 = vld [vmem:[%s1153 + $0x10] sm:$0xff]
        %v1157 = vld [vmem:[%s1153 + $0x18] sm:$0xff]
        %v1158 = vld [vmem:[%s1153 + $0x20] sm:$0xff]
        %v1159 = vld [vmem:[%s1153 + $0x28] sm:$0xff]
        %v1160 = vld [vmem:[%s1153 + $0x30] sm:$0xff]
        %v1161 = vld [vmem:[%s1153 + $0x38] sm:$0xff]
        %v1162 = vld [vmem:[%s1153 + $0x40] sm:$0xff]
        %v1163 = vld [vmem:[%s1153 + $0x48] sm:$0xff]
        %v1164 = vld [vmem:[%s1153 + $0x50] sm:$0xff]
        %v1165 = vld [vmem:[%s1153 + $0x58] sm:$0xff]
        %v1166 = vld [vmem:[%s1153 + $0x60] sm:$0xff]
        %v1167 = vld [vmem:[%s260] sm:$0xff]
        %v1168 = vld [vmem:[%s260 + $0x8] sm:$0xff]
        %v1169 = vld [vmem:[%s260 + $0x10] sm:$0xff]
        %v1170 = vld [vmem:[%s260 + $0x18] sm:$0xff]
        %v1171 = vld [vmem:[%s260 + $0x20] sm:$0xff]
        %v1172 = vld [vmem:[%s260 + $0x28] sm:$0xff]
        %v1173 = vld [vmem:[%s260 + $0x30] sm:$0xff]
        %v1174 = vld [vmem:[%s260 + $0x38] sm:$0xff]
        %v1175 = vld [vmem:[%s260 + $0x40] sm:$0xff]
        %v1176 = vld [vmem:[%s260 + $0x48] sm:$0xff]
        %v1177 = vld [vmem:[%s260 + $0x50] sm:$0xff]
        %v1178 = vld [vmem:[%s260 + $0x58] sm:$0xff]
        %v1179 = vld [vmem:[%s260 + $0x60] sm:$0xff]
        %v1193 = vunpack.c.l.b16 %v1154
        %v1194 = vunpack.c.h.b16 %v1154
        %v1195 = vunpack.c.l.b16 %v1155
        %v1196 = vunpack.c.h.b16 %v1155
        %v1197 = vunpack.c.l.b16 %v1156
        %v1198 = vunpack.c.h.b16 %v1156
        %v1199 = vunpack.c.l.b16 %v1157
        %v1200 = vunpack.c.h.b16 %v1157
        %v1201 = vunpack.c.l.b16 %v1158
        %v1202 = vunpack.c.h.b16 %v1158
        %v1203 = vunpack.c.l.b16 %v1159
        %v1204 = vunpack.c.h.b16 %v1159
        %v1205 = vunpack.c.l.b16 %v1160
        %v1206 = vunpack.c.h.b16 %v1160
        %v1207 = vunpack.c.l.b16 %v1161
        %v1208 = vunpack.c.h.b16 %v1161
        %v1209 = vunpack.c.l.b16 %v1162
        %v1210 = vunpack.c.h.b16 %v1162
        %v1211 = vunpack.c.l.b16 %v1163
        %v1212 = vunpack.c.h.b16 %v1163
        %v1213 = vunpack.c.l.b16 %v1164
        %v1214 = vunpack.c.h.b16 %v1164
        %v1215 = vunpack.c.l.b16 %v1165
        %v1216 = vunpack.c.h.b16 %v1165
        %v1217 = vunpack.c.l.b16 %v1166
        %v1218 = vunpack.c.h.b16 %v1166
        %v1219 = vpack.c.b16 %v1195, %v1193
        %v1220 = vpack.c.b16 %v1196, %v1194
        %v1221 = vpack.c.b16 %v1199, %v1197
        %v1222 = vpack.c.b16 %v1200, %v1198
        %v1223 = vpack.c.b16 %v1203, %v1201
        %v1224 = vpack.c.b16 %v1204, %v1202
        %v1225 = vpack.c.b16 %v1207, %v1205
        %v1226 = vpack.c.b16 %v1208, %v1206
        %v1227 = vpack.c.b16 %v1211, %v1209
        %v1228 = vpack.c.b16 %v1212, %v1210
        %v1229 = vpack.c.b16 %v1215, %v1213
        %v1230 = vpack.c.b16 %v1216, %v1214
        %v1231 = vpack.c.b16 %v1217, %v1217
        %v1232 = vpack.c.b16 %v1218, %v1218
        %1247 = vmatprep.subr.bf16.mxu0 0
        %1248 = vmatpush1.bf16.msra.mxu0 %v1135
        %1249 = vmatprep.subr.bf16.mxu0 0
        %1250 = vmatpush1.bf16.msra.mxu0 %v1136
        %1251 = vmatprep.subr.bf16.mxu0 0
        %1252 = vmatpush1.bf16.msra.mxu0 %v1137
        %1253 = vmatprep.subr.bf16.mxu0 0
        %1254 = vmatpush1.bf16.msra.mxu0 %v1138
        %1255 = vmatprep.subr.bf16.mxu0 0
        %1256 = vmatpush1.bf16.msra.mxu0 %v1139
        %1257 = vmatprep.subr.bf16.mxu0 0
        %1258 = vmatpush1.bf16.msra.mxu0 %v1140
        %1259 = vmatprep.subr.bf16.mxu0 0
        %1260 = vmatpush1.bf16.msra.mxu0 %v1141
        %1261 = vmatprep.subr.bf16.mxu0 0
        %1262 = vmatpush1.bf16.msra.mxu0 %v1142
        %1263 = vmatprep.subr.bf16.mxu0 0
        %1264 = vmatpush1.bf16.msra.mxu0 %v1143
        %1265 = vmatprep.subr.bf16.mxu0 0
        %1266 = vmatpush1.bf16.msra.mxu0 %v1144
        %1267 = vmatprep.subr.bf16.mxu0 0
        %1268 = vmatpush1.bf16.msra.mxu0 %v1145
        %1269 = vmatprep.subr.bf16.mxu0 0
        %1270 = vmatpush1.bf16.msra.mxu0 %v1146
        %1271 = vmatprep.subr.bf16.mxu0 0
        %1272 = vmatpush1.bf16.msra.mxu0 %v1147
        %1273 = vmatprep.subr.bf16.mxu0 0
        %1274 = vmatpush1.bf16.msra.mxu0 %v1148
        %1275 = vmatprep.subr.bf16.mxu0 0
        %1276 = vmatpush1.bf16.msra.mxu0 %v1149
        %1277 = vmatprep.subr.bf16.mxu0 0
        %1278 = vmatpush1.bf16.msra.mxu0 %v1150
        %1279 = vmatprep.mubr.bf16.mxu0 %v1220
        %1280 = vmatmul.mubr.bf16.gmra.mrb[0].mxu0 %v1219
        %v1281 = vpop.f32.mrb[0].mxu0
        %v1282 = vadd.f32 0.0, %v1281
        %v1283 = vpop.f32.mrb[0].mxu0
        %v1284 = vpop.f32.mrb[0].mxu0
        %v1285 = vadd.f32 0.0, %v1284
        %v1286 = vpop.f32.mrb[0].mxu0
        %1287 = vmatprep.mubr.bf16.mxu0 %v1222
        %1288 = vmatmul.mubr.bf16.gmra.mrb[0].mxu0 %v1221
        %v1289 = vpop.f32.mrb[0].mxu0
        %v1290 = vadd.f32 0.0, %v1289
        %v1291 = vpop.f32.mrb[0].mxu0
        %v1292 = vpop.f32.mrb[0].mxu0
        %v1293 = vadd.f32 0.0, %v1292
        %v1294 = vpop.f32.mrb[0].mxu0
        %1295 = vmatprep.mubr.bf16.mxu0 %v1224
        %1296 = vmatmul.mubr.bf16.gmra.mrb[0].mxu0 %v1223
        %v1297 = vpop.f32.mrb[0].mxu0
        %v1298 = vadd.f32 0.0, %v1297
        %v1299 = vpop.f32.mrb[0].mxu0
        %v1300 = vpop.f32.mrb[0].mxu0
        %v1301 = vadd.f32 0.0, %v1300
        %v1302 = vpop.f32.mrb[0].mxu0
        %1303 = vmatprep.mubr.bf16.mxu0 %v1226
        %1304 = vmatmul.mubr.bf16.gmra.mrb[0].mxu0 %v1225
        %v1305 = vpop.f32.mrb[0].mxu0
        %v1306 = vadd.f32 0.0, %v1305
        %v1307 = vpop.f32.mrb[0].mxu0
        %v1308 = vpop.f32.mrb[0].mxu0
        %v1309 = vadd.f32 0.0, %v1308
        %v1310 = vpop.f32.mrb[0].mxu0
        %1311 = vmatprep.mubr.bf16.mxu0 %v1228
        %1312 = vmatmul.mubr.bf16.gmra.mrb[0].mxu0 %v1227
        %v1313 = vpop.f32.mrb[0].mxu0
        %v1314 = vadd.f32 0.0, %v1313
        %v1315 = vpop.f32.mrb[0].mxu0
        %v1316 = vpop.f32.mrb[0].mxu0
        %v1317 = vadd.f32 0.0, %v1316
        %v1318 = vpop.f32.mrb[0].mxu0
        %1319 = vmatprep.mubr.bf16.mxu0 %v1230
        %1320 = vmatmul.mubr.bf16.gmra.mrb[0].mxu0 %v1229
        %v1321 = vpop.f32.mrb[0].mxu0
        %v1322 = vadd.f32 0.0, %v1321
        %v1323 = vpop.f32.mrb[0].mxu0
        %v1324 = vpop.f32.mrb[0].mxu0
        %v1325 = vadd.f32 0.0, %v1324
        %v1326 = vpop.f32.mrb[0].mxu0
        %1327 = vmatprep.mubr.bf16.mxu0 %v1232
        %1328 = vmatmul.mubr.bf16.gmra.mrb[0].mxu0 %v1231
        %v1329 = vpop.f32.mrb[0].mxu0
        %v1330 = vadd.f32 0.0, %v1329
        %v1331 = vpop.f32.mrb[0].mxu0
        %v1332 = vpop.f32.mrb[0].mxu0
        %v1333 = vpop.f32.mrb[0].mxu0
        %1334 = vdwg.mxu0
        %v1335 = vadd.f32 %v1167, %v1282
        %v1336 = vadd.f32 %v1168, %v1285
        %v1337 = vadd.f32 %v1169, %v1290
        %v1338 = vadd.f32 %v1170, %v1293
        %v1339 = vadd.f32 %v1171, %v1298
        %v1340 = vadd.f32 %v1172, %v1301
        %v1341 = vadd.f32 %v1173, %v1306
        %v1342 = vadd.f32 %v1174, %v1309
        %v1343 = vadd.f32 %v1175, %v1314
        %v1344 = vadd.f32 %v1176, %v1317
        %v1345 = vadd.f32 %v1177, %v1322
        %v1346 = vadd.f32 %v1178, %v1325
        %v1347 = vadd.f32 %v1179, %v1330
        %1348 = vst [vmem:[%s260] sm:$0xff] %v1335
        %1349 = vst [vmem:[%s260 + $0x8] sm:$0xff] %v1336
        %1350 = vst [vmem:[%s260 + $0x10] sm:$0xff] %v1337
        %1351 = vst [vmem:[%s260 + $0x18] sm:$0xff] %v1338
        %1352 = vst [vmem:[%s260 + $0x20] sm:$0xff] %v1339
        %1353 = vst [vmem:[%s260 + $0x28] sm:$0xff] %v1340
        %1354 = vst [vmem:[%s260 + $0x30] sm:$0xff] %v1341
        %1355 = vst [vmem:[%s260 + $0x38] sm:$0xff] %v1342
        %1356 = vst [vmem:[%s260 + $0x40] sm:$0xff] %v1343
        %1357 = vst [vmem:[%s260 + $0x48] sm:$0xff] %v1344
        %1358 = vst [vmem:[%s260 + $0x50] sm:$0xff] %v1345
        %1359 = vst [vmem:[%s260 + $0x58] sm:$0xff] %v1346
        %1360 = vst [vmem:[%s260 + $0x60] sm:$0xff] %v1347
        %s1361 = sand.u32 %s132, 1
        %s1362 = scalar_lea.sflag [#allocation4], %s1361
        %s1363 = sand.u32 %s132, 1
        %s1364 = smul.addr %s1363, 104
        %s1365 = scalar_lea.vmem [#allocation7], %s1364
        // Predicated region
        $region45: #{tpu_custom_call.1} parent=31 // pred_check
          %p1366 = pneg %p142
        $region46: #{tpu_custom_call.1} parent=31 // pred_check_branch
          %1368 = sbr.rel (%p1366) target = $region48
        $region47: #{tpu_custom_call.1} parent=31 // pred_region
          %s1369 = smul.u32 13, %s26
          %s1371 = ssub.s32 1664, 1664
          %1372 = vsyncadd %s1362, %s1371
          %s1373 = smul.addr %s1369, 2
          %s1374 = sadd.s32 %s27, %s1373
          %s1375 = smul.addr %s1374, 128
          %s1376 = scalar_lea.hbm %s3, %s1375
          %s1377 = sshll.u32 %s1365, 4
          %s1378 = int_to_ptr.vmem [resolvable:$true] %s1377
          %1383 = dma.vmem_to_hbm [thread:$0]  %s1378, 1664, %s1376, %s1362, 128, 256, 8
        $region48: #{tpu_custom_call.1} parent=31 // pred_fallthru
          _
      $region32: #{tpu_custom_call.1} parent=5 // pred_fallthru
        _
      %p1384 = scmp.le.s32.totalorder 2, %s16
      // Predicated region
      $region49: #{tpu_custom_call.1} parent=5 // pred_check
        %p1385 = pneg %p1384
      $region50: #{tpu_custom_call.1} parent=5 // pred_check_branch
        %1387 = sbr.rel (%p1385) target = $region52
      $region51: #{tpu_custom_call.1} parent=5 // pred_region
        %s1388 = ssub.s32 %s16, 2
        // Predicated region
        $region53: #{tpu_custom_call.1} parent=51 // pred_check
          %p1389 = pneg %p148
        $region54: #{tpu_custom_call.1} parent=51 // pred_check_branch
          %1391 = sbr.rel (%p1389) target = $region56
        $region55: #{tpu_custom_call.1} parent=51 // pred_region
          %s1392 = sand.u32 %s133, 1
          %s1393 = scalar_lea.sflag [#allocation4], %s1392
          %s1394 = sand.u32 %s133, 1
          %s1395 = smul.addr %s1394, 104
          %s1396 = scalar_lea.vmem [#allocation7], %s1395
          %1397 = dma.done %s1393, 1664
        $region56: #{tpu_custom_call.1} parent=51 // pred_fallthru
          _
      $region52: #{tpu_custom_call.1} parent=5 // pred_fallthru
        _
    $region6: #{tpu_custom_call.1} parent=1 // loop_footer
      %s20 = sadd.s32 1, %s16
    $region7: #{tpu_custom_call.1} parent=1 // loop_footer_branch
      %15 = sbr.rel target = $region3
    $region8: #{tpu_custom_call.1} parent=1 // loop_exit
      _
    %1398 = vsyncpa [#allocation3], 1
    %s1399 = scalar_lea.sflag [#allocation3], 1
    %1400 = vsyncpa %s1399, 1
    %1401 = vsyncpa [#allocation6], 1
    %s1402 = scalar_lea.sflag [#allocation6], 1
    %1403 = vsyncpa %s1402, 1
    %1404 = vsyncpa [#allocation4], 1
    %s1405 = scalar_lea.sflag [#allocation4], 1
    %1406 = vsyncpa %s1405, 1

</llo_original>
